<compile_context>
chip_gen: v5e
topology: v5e:2x2
jax: 0.10.0
libtpu: 0.0.40
codegen_flags: <defaults>
</compile_context>

<pallas_src>
import functools

import jax
import jax.numpy as jnp
from jax import lax
from jax.experimental import pallas as pl
from jax.experimental.pallas import tpu as pltpu

KH = KW = 5
GROUP = 8                 # sublane-aligned rows per (channel, kw) patch group
NPAT = 2 * KW * GROUP     # 80 patch-matrix rows (2 channels x 5 kw groups x 8)


def _relu(x):
    return jnp.maximum(x, 0.0)


def _dot(a, b):
    return jnp.dot(a, b, preferred_element_type=jnp.float32)


# ---------------------------------------------------------------------------
# Fused Pallas kernel: whole forward for G batch elements per grid step.
# ---------------------------------------------------------------------------
def _cnn2d_kernel(x_ref, w5_ref, b5_ref, w1_ref, b1_ref, w2_ref, b2_ref,
                  w3_ref, b3_ref, wl1_ref, bl1_ref, wl2_ref, bl2_ref,
                  o_ref, pat_ref, s_ref, *, n, M, G, alpha):
    P = n * n

    # Pad rows (kh = 5..7 of every 8-row group) must stay zero: zero the whole
    # patch scratch once per grid step (80 x P f32 ~= 80 KiB of stores, cheap).
    pat_ref[...] = jnp.zeros_like(pat_ref)
    s_ref[...] = jnp.zeros_like(s_ref)

    # Loop-invariant iotas, computed once per grid step.
    col_j = lax.broadcasted_iota(jnp.int32, (KH, P), 1) % n   # lane -> column j
    row_kh = lax.broadcasted_iota(jnp.int32, (KH, P), 0)      # sublane -> kh
    lane_g = lax.broadcasted_iota(jnp.int32, (alpha, G), 1)   # lane -> image slot

    def build_patches(plane, base):
        """Write the 25 circular-5x5 patch rows of a (1, P) plane into
        pat_ref rows [base + kw*8 + kh] (kh = 0..4; kh = 5..7 stay zero)."""
        # S[kh, :] = plane flat-rolled by -kh*n  (exact row shift: multiple of n).
        # Built via sublane broadcast + roll + select (no concatenation).
        Sb = jnp.broadcast_to(plane, (KH, P))
        S = Sb
        for kh in range(1, KH):
            S = jnp.where(row_kh == kh,
                          pltpu.roll(Sb, (P - kh * n) % P, axis=1), S)
        pat_ref[base:base + KH, :] = S                     # kw = 0 group
        for kw in range(1, KW):
            a_roll = pltpu.roll(S, P - kw, axis=1)         # columns with j+kw <  n
            b_roll = pltpu.roll(S, n - kw, axis=1)         # columns with j+kw >= n
            blk = jnp.where(col_j < (n - kw), a_roll, b_roll)
            r0 = base + kw * GROUP                         # multiple of 8 -> aligned
            pat_ref[r0:r0 + KH, :] = blk

    def conv_stack(idx):
        """Fused (u,a) circular 5x5 conv + relu, then 2x (1x1 conv + relu)."""
        h = _relu(_dot(w5_ref[idx], pat_ref[...]) + b5_ref[idx])   # (alpha, P)
        h = _relu(_dot(w1_ref[idx], h) + b1_ref[idx])
        h = _relu(_dot(w2_ref[idx], h) + b2_ref[idx])
        return h

    def per_image(g, carry):
        x = x_ref[g]                                   # (2, P)
        u = x[0:1, :]                                  # u0 plane (row-major flatten)
        build_patches(x[1:2, :], KW * GROUP)           # 'a' patches: built once/image

        # TODO(synk): switch to lax.fori_loop + dynamic weight indexing if M grows large.
        for i in range(M):                             # M Component1 layers
            build_patches(u, 0)
            h = conv_stack(i)
            u = _dot(w3_ref[i], h) + b3_ref[i]         # (1, P)

        build_patches(u, 0)                            # Component2 conv stack
        h = conv_stack(M)
        s = jnp.sum(h, axis=1, keepdims=True)          # (alpha, 1)  sum-pool
        s_ref[...] = jnp.where(lane_g == g, s, s_ref[...])
        return carry

    lax.fori_loop(0, G, per_image, 0)

    # Batched Linear head over the G images of this step (one MXU push each).
    z = _relu(_dot(wl1_ref[...], s_ref[...]) + bl1_ref[...])       # (alpha, G)
    y = _dot(wl2_ref[...], z) + bl2_ref[...]                       # (1, G)
    o_ref[0] = y


# ---------------------------------------------------------------------------
# Wrapper: weight reshaping + single pallas_call over the batch.
# ---------------------------------------------------------------------------
def cnn2d_pallas(inputs, comp1_params, comp2_params, n, *, images_per_step=None):
    B = inputs.shape[0]
    P = n * n
    M = len(comp1_params)
    alpha = comp2_params["w5"].shape[0]

    # Images per grid step: amortize the per-step pipeline overhead over several
    # images, but keep >= 2 grid steps when possible (v7x has 2 TensorCores and
    # the batch axis is marked "parallel").
    if images_per_step is None:
        images_per_step = max(1, min(8, B // 2)) if B >= 2 else 1
    G = int(max(1, min(images_per_step, B)))
    steps = -(-B // G)
    Bp = steps * G

    def conv5_mat(w):   # (alpha,2,5,5) -> (alpha,80); col = ch*40 + kw*8 + kh
        o = jnp.zeros((w.shape[0], 2, KW, GROUP), w.dtype)
        o = o.at[:, :, :, :KH].set(jnp.transpose(w, (0, 1, 3, 2)))
        return o.reshape(w.shape[0], NPAT)

    def conv1_mat(w):   # (out,in,1,1) -> (out,in)
        return w.reshape(w.shape[0], w.shape[1])

    def colv(b):        # (k,) -> (k,1)
        return b.reshape(-1, 1)

    stacked = list(comp1_params) + [comp2_params]                 # M+1 conv stacks
    w5 = jnp.stack([conv5_mat(p["w5"]) for p in stacked])         # (M+1, alpha, 80)
    b5 = jnp.stack([colv(p["b5"]) for p in stacked])              # (M+1, alpha, 1)
    w1 = jnp.stack([conv1_mat(p["w1"]) for p in stacked])
    b1 = jnp.stack([colv(p["b1"]) for p in stacked])
    w2 = jnp.stack([conv1_mat(p["w2"]) for p in stacked])
    b2 = jnp.stack([colv(p["b2"]) for p in stacked])
    if M > 0:
        w3 = jnp.stack([conv1_mat(p["w3"]) for p in comp1_params])  # (M, 1, alpha)
        b3 = jnp.stack([colv(p["b3"]) for p in comp1_params])       # (M, 1, 1)
    else:
        w3 = jnp.zeros((1, 1, alpha), jnp.float32)
        b3 = jnp.zeros((1, 1, 1), jnp.float32)
    wl1 = comp2_params["wl1"]                         # (alpha, alpha)
    bl1 = colv(comp2_params["bl1"])                   # (alpha, 1)
    wl2 = comp2_params["wl2"]                         # (1, alpha)
    bl2 = colv(comp2_params["bl2"])                   # (1, 1)

    weights = (w5, b5, w1, b1, w2, b2, w3, b3, wl1, bl1, wl2, bl2)

    def bcast_spec(arr):                              # same full block every step
        nd = arr.ndim
        return pl.BlockSpec(arr.shape, lambda b, nd=nd: (0,) * nd)

    x = inputs.reshape(B, 2, P).astype(jnp.float32)
    if Bp != B:
        x = jnp.concatenate([x, jnp.zeros((Bp - B, 2, P), jnp.float32)], axis=0)

    out = pl.pallas_call(
        functools.partial(_cnn2d_kernel, n=n, M=M, G=G, alpha=alpha),
        out_shape=jax.ShapeDtypeStruct((steps, 1, G), jnp.float32),
        grid=(steps,),
        in_specs=[pl.BlockSpec((G, 2, P), lambda b: (b, 0, 0))]
                 + [bcast_spec(w) for w in weights],
        out_specs=pl.BlockSpec((1, 1, G), lambda b: (b, 0, 0)),
        scratch_shapes=[pltpu.VMEM((NPAT, P), jnp.float32),     # merged u/a patch matrix
                        pltpu.VMEM((alpha, G), jnp.float32)],   # pooled vectors of the step
        compiler_params=pltpu.CompilerParams(
            dimension_semantics=("parallel",),
            vmem_limit_bytes=32 * 1024 * 1024),
    )(x, *weights)
    return out.reshape(Bp)[:B]                        # == nn.Flatten(0)


# ---------------------------------------------------------------------------
# Pure-JAX reference (mirrors the PyTorch forward exactly)
# ---------------------------------------------------------------------------
def _conv_ref(x, w, b):
    y = jax.lax.conv_general_dilated(
        x, w, (1, 1), "VALID", dimension_numbers=("NCHW", "OIHW", "NCHW"))
    return y + b.reshape(1, -1, 1, 1)


def cnn2d_ref(inputs, comp1_params, comp2_params, n):
    u0 = inputs[:, 0:1]
    a = inputs[:, 1:2]
    pad = ((0, 0), (0, 0), (0, 4), (0, 4))
    for p in comp1_params:
        xp = jnp.pad(jnp.concatenate([u0, a], axis=1), pad, mode="wrap")
        h = jax.nn.relu(_conv_ref(xp, p["w5"], p["b5"]))
        h = jax.nn.relu(_conv_ref(h, p["w1"], p["b1"]))
        h = jax.nn.relu(_conv_ref(h, p["w2"], p["b2"]))
        u0 = _conv_ref(h, p["w3"], p["b3"])
    xp = jnp.pad(jnp.concatenate([u0, a], axis=1), pad, mode="wrap")
    q = comp2_params
    h = jax.nn.relu(_conv_ref(xp, q["w5"], q["b5"]))
    h = jax.nn.relu(_conv_ref(h, q["w1"], q["b1"]))
    h = jax.nn.relu(_conv_ref(h, q["w2"], q["b2"]))
    s = jnp.sum(h, axis=(2, 3))                       # sum-pool + flatten
    z = jax.nn.relu(s @ q["wl1"].T + q["bl1"])
    out = z @ q["wl2"].T + q["bl2"]
    return out.reshape(-1)


# ---------------------------------------------------------------------------
# Deterministic parameter init (synthetic weights, PyTorch shapes)
# ---------------------------------------------------------------------------
def init_params(key, M, alpha):
    keys = iter(jax.random.split(key, 128))

    def w(shape, scale=0.1):
        return scale * jax.random.normal(next(keys), shape, jnp.float32)

    comp1 = []
    for _ in range(M):
        comp1.append(dict(
            w5=w((alpha, 2, KH, KW)), b5=w((alpha,)),
            w1=w((alpha, alpha, 1, 1)), b1=w((alpha,)),
            w2=w((alpha, alpha, 1, 1)), b2=w((alpha,)),
            w3=w((1, alpha, 1, 1)), b3=w((1,)),
        ))
    comp2 = dict(
        w5=w((alpha, 2, KH, KW)), b5=w((alpha,)),
        w1=w((alpha, alpha, 1, 1)), b1=w((alpha,)),
        w2=w((alpha, alpha, 1, 1)), b2=w((alpha,)),
        wl1=w((alpha, alpha)), bl1=w((alpha,)),
        wl2=w((1, alpha)), bl2=w((1,)),
    )
    return comp1, comp2


if __name__ == "__main__":
    n, M, alpha, B = 16, 2, 8, 8
    key = jax.random.PRNGKey(0)
    k_in, k_par = jax.random.split(key)
    inputs = jax.random.normal(k_in, (B, 2, n, n), jnp.float32)  # NCHW: ch0=u, ch1=a
    comp1_params, comp2_params = init_params(k_par, M, alpha)

    out = cnn2d_pallas(inputs, comp1_params, comp2_params, n)
    out = jax.block_until_ready(out)

    ref = cnn2d_ref(inputs, comp1_params, comp2_params, n)
    assert out.shape == (B,), out.shape
    assert jnp.allclose(out, ref, atol=1e-3, rtol=1e-3), (out, ref)
    print("KERNEL_OK")
</pallas_src>

<mosaic_0001>
module attributes {stable_mosaic.version = 11 : i64} {
  func.func @_cnn2d_kernel(%arg0: i32, %arg1: memref<4x2x256xf32, #tpu.memory_space<vmem>>, %arg2: memref<3x8x80xf32, #tpu.memory_space<vmem>>, %arg3: memref<3x8x1xf32, #tpu.memory_space<vmem>>, %arg4: memref<3x8x8xf32, #tpu.memory_space<vmem>>, %arg5: memref<3x8x1xf32, #tpu.memory_space<vmem>>, %arg6: memref<3x8x8xf32, #tpu.memory_space<vmem>>, %arg7: memref<3x8x1xf32, #tpu.memory_space<vmem>>, %arg8: memref<2x1x8xf32, #tpu.memory_space<vmem>>, %arg9: memref<2x1x1xf32, #tpu.memory_space<vmem>>, %arg10: memref<8x8xf32, #tpu.memory_space<vmem>>, %arg11: memref<8x1xf32, #tpu.memory_space<vmem>>, %arg12: memref<1x8xf32, #tpu.memory_space<vmem>>, %arg13: memref<1x1xf32, #tpu.memory_space<vmem>>, %arg14: memref<1x1x4xf32, #tpu.memory_space<vmem>>, %arg15: memref<80x256xf32, #tpu.memory_space<vmem>>, %arg16: memref<8x4xf32, #tpu.memory_space<vmem>>) attributes {dimension_semantics = [#tpu.dimension_semantics<parallel>], iteration_bounds = array<i64: 2>, scalar_prefetch = 0 : i64, scratch_operands = 2 : i64, tpu.core_type = #tpu.core_type<tc>, window_params = [{transform_indices = @transform_0, window_bounds = array<i64: 4, 2, 256>}, {pipeline_mode = #tpu.pipeline_mode<synchronous>, transform_indices = @transform_1, window_bounds = array<i64: 3, 8, 80>}, {pipeline_mode = #tpu.pipeline_mode<synchronous>, transform_indices = @transform_2, window_bounds = array<i64: 3, 8, 1>}, {pipeline_mode = #tpu.pipeline_mode<synchronous>, transform_indices = @transform_3, window_bounds = array<i64: 3, 8, 8>}, {pipeline_mode = #tpu.pipeline_mode<synchronous>, transform_indices = @transform_4, window_bounds = array<i64: 3, 8, 1>}, {pipeline_mode = #tpu.pipeline_mode<synchronous>, transform_indices = @transform_5, window_bounds = array<i64: 3, 8, 8>}, {pipeline_mode = #tpu.pipeline_mode<synchronous>, transform_indices = @transform_6, window_bounds = array<i64: 3, 8, 1>}, {pipeline_mode = #tpu.pipeline_mode<synchronous>, transform_indices = @transform_7, window_bounds = array<i64: 2, 1, 8>}, {pipeline_mode = #tpu.pipeline_mode<synchronous>, transform_indices = @transform_8, window_bounds = array<i64: 2, 1, 1>}, {pipeline_mode = #tpu.pipeline_mode<synchronous>, transform_indices = @transform_9, window_bounds = array<i64: 8, 8>}, {pipeline_mode = #tpu.pipeline_mode<synchronous>, transform_indices = @transform_10, window_bounds = array<i64: 8, 1>}, {pipeline_mode = #tpu.pipeline_mode<synchronous>, transform_indices = @transform_11, window_bounds = array<i64: 1, 8>}, {pipeline_mode = #tpu.pipeline_mode<synchronous>, transform_indices = @transform_12, window_bounds = array<i64: 1, 1>}, {transform_indices = @transform_13, window_bounds = array<i64: 1, 1, 4>}]} {
    %cst = arith.constant 0.000000e+00 : f32
    %0 = vector.broadcast %cst : f32 to vector<80x256xf32>
    %c0 = arith.constant 0 : index
    %c0_0 = arith.constant 0 : index
    %1 = vector.load %arg15[%c0, %c0_0] : memref<80x256xf32, #tpu.memory_space<vmem>>, vector<80x256xf32>
    tpu.vector_store %arg15[%c0, %c0_0], %0 {strides = array<i32>} : memref<80x256xf32, #tpu.memory_space<vmem>>, vector<80x256xf32>,
    %cst_1 = arith.constant 0.000000e+00 : f32
    %2 = vector.broadcast %cst_1 : f32 to vector<8x4xf32>
    %c0_2 = arith.constant 0 : index
    %c0_3 = arith.constant 0 : index
    %3 = vector.load %arg16[%c0_2, %c0_3] : memref<8x4xf32, #tpu.memory_space<vmem>>, vector<8x4xf32>
    tpu.vector_store %arg16[%c0_2, %c0_3], %2 {strides = array<i32>} : memref<8x4xf32, #tpu.memory_space<vmem>>, vector<8x4xf32>,
    %4 = tpu.iota {dimensions = array<i32: 1>} : vector<5x256xi32>
    %c16_i32 = arith.constant 16 : i32
    %c0_i32 = arith.constant 0 : i32
    %5 = arith.cmpi eq, %c16_i32, %c0_i32 : i32
    %c1_i32 = arith.constant 1 : i32
    %6 = arith.select %5, %c1_i32, %c16_i32 : i32
    %7 = vector.broadcast %6 : i32 to vector<5x256xi32>
    %8 = arith.remsi %4, %7 : vector<5x256xi32>
    %c0_i32_4 = arith.constant 0 : i32
    %9 = vector.broadcast %c0_i32_4 : i32 to vector<5x256xi32>
    %10 = arith.cmpi ne, %8, %9 : vector<5x256xi32>
    %c0_i32_5 = arith.constant 0 : i32
    %11 = vector.broadcast %c0_i32_5 : i32 to vector<5x256xi32>
    %12 = arith.cmpi slt, %8, %11 : vector<5x256xi32>
    %c0_i32_6 = arith.constant 0 : i32
    %13 = arith.cmpi slt, %6, %c0_i32_6 : i32
    %14 = vector.broadcast %13 : i1 to vector<5x256xi1>
    %15 = vector.broadcast %14 : vector<5x256xi1> to vector<5x256xi1>
    %16 = arith.xori %12, %15 : vector<5x256xi1>
    %17 = arith.andi %16, %10 : vector<5x256xi1>
    %18 = vector.broadcast %6 : i32 to vector<5x256xi32>
    %19 = arith.addi %8, %18 : vector<5x256xi32>
    %20 = arith.select %17, %19, %8 : vector<5x256xi1>, vector<5x256xi32>
    %21 = tpu.iota {dimensions = array<i32: 0>} : vector<5x256xi32>
    %22 = tpu.iota {dimensions = array<i32: 1>} : vector<8x4xi32>
    %c0_i32_7 = arith.constant 0 : i32
    %c4_i32 = arith.constant 4 : i32
    %23 = arith.addi %c0_i32_7, %c4_i32 : i32
    %c1_i32_8 = arith.constant 1 : i32
    scf.for %arg17 = %c0_i32_7 to %23 step %c1_i32_8  : i32 {
      %40 = arith.index_cast %arg17 : i32 to index
      %c0_26 = arith.constant 0 : index
      %c0_27 = arith.constant 0 : index
      %41 = vector.load %arg1[%40, %c0_26, %c0_27] : memref<4x2x256xf32, #tpu.memory_space<vmem>>, vector<1x2x256xf32>
      %42 = vector.shape_cast %41 : vector<1x2x256xf32> to vector<2x256xf32>
      %43 = vector.extract_strided_slice %42 {offsets = [0, 0], sizes = [1, 256], strides = [1, 1]} : vector<2x256xf32> to vector<1x256xf32>
      %44 = vector.extract_strided_slice %42 {offsets = [1, 0], sizes = [1, 256], strides = [1, 1]} : vector<2x256xf32> to vector<1x256xf32>
      %45 = vector.shape_cast %44 : vector<1x256xf32> to vector<1x256xf32>
      %46 = vector.broadcast %45 : vector<1x256xf32> to vector<5x256xf32>
      %c1_i32_28 = arith.constant 1 : i32
      %47 = vector.broadcast %c1_i32_28 : i32 to vector<5x256xi32>
      %48 = arith.cmpi eq, %21, %47 : vector<5x256xi32>
      %c240_i32 = arith.constant 240 : i32
      %49 = tpu.dynamic_rotate %46 by %c240_i32 dim 1 : vector<5x256xf32>, i32 -> vector<5x256xf32>
      %50 = arith.select %48, %49, %46 : vector<5x256xi1>, vector<5x256xf32>
      %c2_i32 = arith.constant 2 : i32
      %51 = vector.broadcast %c2_i32 : i32 to vector<5x256xi32>
      %52 = arith.cmpi eq, %21, %51 : vector<5x256xi32>
      %c224_i32 = arith.constant 224 : i32
      %53 = tpu.dynamic_rotate %46 by %c224_i32 dim 1 : vector<5x256xf32>, i32 -> vector<5x256xf32>
      %54 = arith.select %52, %53, %50 : vector<5x256xi1>, vector<5x256xf32>
      %c3_i32 = arith.constant 3 : i32
      %55 = vector.broadcast %c3_i32 : i32 to vector<5x256xi32>
      %56 = arith.cmpi eq, %21, %55 : vector<5x256xi32>
      %c208_i32 = arith.constant 208 : i32
      %57 = tpu.dynamic_rotate %46 by %c208_i32 dim 1 : vector<5x256xf32>, i32 -> vector<5x256xf32>
      %58 = arith.select %56, %57, %54 : vector<5x256xi1>, vector<5x256xf32>
      %c4_i32_29 = arith.constant 4 : i32
      %59 = vector.broadcast %c4_i32_29 : i32 to vector<5x256xi32>
      %60 = arith.cmpi eq, %21, %59 : vector<5x256xi32>
      %c192_i32 = arith.constant 192 : i32
      %61 = tpu.dynamic_rotate %46 by %c192_i32 dim 1 : vector<5x256xf32>, i32 -> vector<5x256xf32>
      %62 = arith.select %60, %61, %58 : vector<5x256xi1>, vector<5x256xf32>
      %c40 = arith.constant 40 : index
      %c0_30 = arith.constant 0 : index
      %63 = vector.load %arg15[%c40, %c0_30] : memref<80x256xf32, #tpu.memory_space<vmem>>, vector<5x256xf32>
      tpu.vector_store %arg15[%c40, %c0_30], %62 {strides = array<i32>} : memref<80x256xf32, #tpu.memory_space<vmem>>, vector<5x256xf32>,
      %c255_i32 = arith.constant 255 : i32
      %64 = tpu.dynamic_rotate %62 by %c255_i32 dim 1 : vector<5x256xf32>, i32 -> vector<5x256xf32>
      %c15_i32 = arith.constant 15 : i32
      %65 = tpu.dynamic_rotate %62 by %c15_i32 dim 1 : vector<5x256xf32>, i32 -> vector<5x256xf32>
      %c15_i32_31 = arith.constant 15 : i32
      %66 = vector.broadcast %c15_i32_31 : i32 to vector<5x256xi32>
      %67 = arith.cmpi slt, %20, %66 : vector<5x256xi32>
      %68 = arith.select %67, %64, %65 : vector<5x256xi1>, vector<5x256xf32>
      %c48 = arith.constant 48 : index
      %c0_32 = arith.constant 0 : index
      %69 = vector.load %arg15[%c48, %c0_32] : memref<80x256xf32, #tpu.memory_space<vmem>>, vector<5x256xf32>
      tpu.vector_store %arg15[%c48, %c0_32], %68 {strides = array<i32>} : memref<80x256xf32, #tpu.memory_space<vmem>>, vector<5x256xf32>,
      %c254_i32 = arith.constant 254 : i32
      %70 = tpu.dynamic_rotate %62 by %c254_i32 dim 1 : vector<5x256xf32>, i32 -> vector<5x256xf32>
      %c14_i32 = arith.constant 14 : i32
      %71 = tpu.dynamic_rotate %62 by %c14_i32 dim 1 : vector<5x256xf32>, i32 -> vector<5x256xf32>
      %c14_i32_33 = arith.constant 14 : i32
      %72 = vector.broadcast %c14_i32_33 : i32 to vector<5x256xi32>
      %73 = arith.cmpi slt, %20, %72 : vector<5x256xi32>
      %74 = arith.select %73, %70, %71 : vector<5x256xi1>, vector<5x256xf32>
      %c56 = arith.constant 56 : index
      %c0_34 = arith.constant 0 : index
      %75 = vector.load %arg15[%c56, %c0_34] : memref<80x256xf32, #tpu.memory_space<vmem>>, vector<5x256xf32>
      tpu.vector_store %arg15[%c56, %c0_34], %74 {strides = array<i32>} : memref<80x256xf32, #tpu.memory_space<vmem>>, vector<5x256xf32>,
      %c253_i32 = arith.constant 253 : i32
      %76 = tpu.dynamic_rotate %62 by %c253_i32 dim 1 : vector<5x256xf32>, i32 -> vector<5x256xf32>
      %c13_i32 = arith.constant 13 : i32
      %77 = tpu.dynamic_rotate %62 by %c13_i32 dim 1 : vector<5x256xf32>, i32 -> vector<5x256xf32>
      %c13_i32_35 = arith.constant 13 : i32
      %78 = vector.broadcast %c13_i32_35 : i32 to vector<5x256xi32>
      %79 = arith.cmpi slt, %20, %78 : vector<5x256xi32>
      %80 = arith.select %79, %76, %77 : vector<5x256xi1>, vector<5x256xf32>
      %c64 = arith.constant 64 : index
      %c0_36 = arith.constant 0 : index
      %81 = vector.load %arg15[%c64, %c0_36] : memref<80x256xf32, #tpu.memory_space<vmem>>, vector<5x256xf32>
      tpu.vector_store %arg15[%c64, %c0_36], %80 {strides = array<i32>} : memref<80x256xf32, #tpu.memory_space<vmem>>, vector<5x256xf32>,
      %c252_i32 = arith.constant 252 : i32
      %82 = tpu.dynamic_rotate %62 by %c252_i32 dim 1 : vector<5x256xf32>, i32 -> vector<5x256xf32>
      %c12_i32 = arith.constant 12 : i32
      %83 = tpu.dynamic_rotate %62 by %c12_i32 dim 1 : vector<5x256xf32>, i32 -> vector<5x256xf32>
      %c12_i32_37 = arith.constant 12 : i32
      %84 = vector.broadcast %c12_i32_37 : i32 to vector<5x256xi32>
      %85 = arith.cmpi slt, %20, %84 : vector<5x256xi32>
      %86 = arith.select %85, %82, %83 : vector<5x256xi1>, vector<5x256xf32>
      %c72 = arith.constant 72 : index
      %c0_38 = arith.constant 0 : index
      %87 = vector.load %arg15[%c72, %c0_38] : memref<80x256xf32, #tpu.memory_space<vmem>>, vector<5x256xf32>
      tpu.vector_store %arg15[%c72, %c0_38], %86 {strides = array<i32>} : memref<80x256xf32, #tpu.memory_space<vmem>>, vector<5x256xf32>,
      %88 = vector.shape_cast %43 : vector<1x256xf32> to vector<1x256xf32>
      %89 = vector.broadcast %88 : vector<1x256xf32> to vector<5x256xf32>
      %c1_i32_39 = arith.constant 1 : i32
      %90 = vector.broadcast %c1_i32_39 : i32 to vector<5x256xi32>
      %91 = arith.cmpi eq, %21, %90 : vector<5x256xi32>
      %c240_i32_40 = arith.constant 240 : i32
      %92 = tpu.dynamic_rotate %89 by %c240_i32_40 dim 1 : vector<5x256xf32>, i32 -> vector<5x256xf32>
      %93 = arith.select %91, %92, %89 : vector<5x256xi1>, vector<5x256xf32>
      %c2_i32_41 = arith.constant 2 : i32
      %94 = vector.broadcast %c2_i32_41 : i32 to vector<5x256xi32>
      %95 = arith.cmpi eq, %21, %94 : vector<5x256xi32>
      %c224_i32_42 = arith.constant 224 : i32
      %96 = tpu.dynamic_rotate %89 by %c224_i32_42 dim 1 : vector<5x256xf32>, i32 -> vector<5x256xf32>
      %97 = arith.select %95, %96, %93 : vector<5x256xi1>, vector<5x256xf32>
      %c3_i32_43 = arith.constant 3 : i32
      %98 = vector.broadcast %c3_i32_43 : i32 to vector<5x256xi32>
      %99 = arith.cmpi eq, %21, %98 : vector<5x256xi32>
      %c208_i32_44 = arith.constant 208 : i32
      %100 = tpu.dynamic_rotate %89 by %c208_i32_44 dim 1 : vector<5x256xf32>, i32 -> vector<5x256xf32>
      %101 = arith.select %99, %100, %97 : vector<5x256xi1>, vector<5x256xf32>
      %c4_i32_45 = arith.constant 4 : i32
      %102 = vector.broadcast %c4_i32_45 : i32 to vector<5x256xi32>
      %103 = arith.cmpi eq, %21, %102 : vector<5x256xi32>
      %c192_i32_46 = arith.constant 192 : i32
      %104 = tpu.dynamic_rotate %89 by %c192_i32_46 dim 1 : vector<5x256xf32>, i32 -> vector<5x256xf32>
      %105 = arith.select %103, %104, %101 : vector<5x256xi1>, vector<5x256xf32>
      %c0_47 = arith.constant 0 : index
      %c0_48 = arith.constant 0 : index
      %106 = vector.load %arg15[%c0_47, %c0_48] : memref<80x256xf32, #tpu.memory_space<vmem>>, vector<5x256xf32>
      tpu.vector_store %arg15[%c0_47, %c0_48], %105 {strides = array<i32>} : memref<80x256xf32, #tpu.memory_space<vmem>>, vector<5x256xf32>,
      %c255_i32_49 = arith.constant 255 : i32
      %107 = tpu.dynamic_rotate %105 by %c255_i32_49 dim 1 : vector<5x256xf32>, i32 -> vector<5x256xf32>
      %c15_i32_50 = arith.constant 15 : i32
      %108 = tpu.dynamic_rotate %105 by %c15_i32_50 dim 1 : vector<5x256xf32>, i32 -> vector<5x256xf32>
      %c15_i32_51 = arith.constant 15 : i32
      %109 = vector.broadcast %c15_i32_51 : i32 to vector<5x256xi32>
      %110 = arith.cmpi slt, %20, %109 : vector<5x256xi32>
      %111 = arith.select %110, %107, %108 : vector<5x256xi1>, vector<5x256xf32>
      %c8 = arith.constant 8 : index
      %c0_52 = arith.constant 0 : index
      %112 = vector.load %arg15[%c8, %c0_52] : memref<80x256xf32, #tpu.memory_space<vmem>>, vector<5x256xf32>
      tpu.vector_store %arg15[%c8, %c0_52], %111 {strides = array<i32>} : memref<80x256xf32, #tpu.memory_space<vmem>>, vector<5x256xf32>,
      %c254_i32_53 = arith.constant 254 : i32
      %113 = tpu.dynamic_rotate %105 by %c254_i32_53 dim 1 : vector<5x256xf32>, i32 -> vector<5x256xf32>
      %c14_i32_54 = arith.constant 14 : i32
      %114 = tpu.dynamic_rotate %105 by %c14_i32_54 dim 1 : vector<5x256xf32>, i32 -> vector<5x256xf32>
      %c14_i32_55 = arith.constant 14 : i32
      %115 = vector.broadcast %c14_i32_55 : i32 to vector<5x256xi32>
      %116 = arith.cmpi slt, %20, %115 : vector<5x256xi32>
      %117 = arith.select %116, %113, %114 : vector<5x256xi1>, vector<5x256xf32>
      %c16 = arith.constant 16 : index
      %c0_56 = arith.constant 0 : index
      %118 = vector.load %arg15[%c16, %c0_56] : memref<80x256xf32, #tpu.memory_space<vmem>>, vector<5x256xf32>
      tpu.vector_store %arg15[%c16, %c0_56], %117 {strides = array<i32>} : memref<80x256xf32, #tpu.memory_space<vmem>>, vector<5x256xf32>,
      %c253_i32_57 = arith.constant 253 : i32
      %119 = tpu.dynamic_rotate %105 by %c253_i32_57 dim 1 : vector<5x256xf32>, i32 -> vector<5x256xf32>
      %c13_i32_58 = arith.constant 13 : i32
      %120 = tpu.dynamic_rotate %105 by %c13_i32_58 dim 1 : vector<5x256xf32>, i32 -> vector<5x256xf32>
      %c13_i32_59 = arith.constant 13 : i32
      %121 = vector.broadcast %c13_i32_59 : i32 to vector<5x256xi32>
      %122 = arith.cmpi slt, %20, %121 : vector<5x256xi32>
      %123 = arith.select %122, %119, %120 : vector<5x256xi1>, vector<5x256xf32>
      %c24 = arith.constant 24 : index
      %c0_60 = arith.constant 0 : index
      %124 = vector.load %arg15[%c24, %c0_60] : memref<80x256xf32, #tpu.memory_space<vmem>>, vector<5x256xf32>
      tpu.vector_store %arg15[%c24, %c0_60], %123 {strides = array<i32>} : memref<80x256xf32, #tpu.memory_space<vmem>>, vector<5x256xf32>,
      %c252_i32_61 = arith.constant 252 : i32
      %125 = tpu.dynamic_rotate %105 by %c252_i32_61 dim 1 : vector<5x256xf32>, i32 -> vector<5x256xf32>
      %c12_i32_62 = arith.constant 12 : i32
      %126 = tpu.dynamic_rotate %105 by %c12_i32_62 dim 1 : vector<5x256xf32>, i32 -> vector<5x256xf32>
      %c12_i32_63 = arith.constant 12 : i32
      %127 = vector.broadcast %c12_i32_63 : i32 to vector<5x256xi32>
      %128 = arith.cmpi slt, %20, %127 : vector<5x256xi32>
      %129 = arith.select %128, %125, %126 : vector<5x256xi1>, vector<5x256xf32>
      %c32 = arith.constant 32 : index
      %c0_64 = arith.constant 0 : index
      %130 = vector.load %arg15[%c32, %c0_64] : memref<80x256xf32, #tpu.memory_space<vmem>>, vector<5x256xf32>
      tpu.vector_store %arg15[%c32, %c0_64], %129 {strides = array<i32>} : memref<80x256xf32, #tpu.memory_space<vmem>>, vector<5x256xf32>,
      %c0_65 = arith.constant 0 : index
      %c0_66 = arith.constant 0 : index
      %c0_67 = arith.constant 0 : index
      %131 = vector.load %arg2[%c0_65, %c0_66, %c0_67] : memref<3x8x80xf32, #tpu.memory_space<vmem>>, vector<1x8x80xf32>
      %132 = vector.shape_cast %131 : vector<1x8x80xf32> to vector<8x80xf32>
      %c0_68 = arith.constant 0 : index
      %c0_69 = arith.constant 0 : index
      %133 = vector.load %arg15[%c0_68, %c0_69] : memref<80x256xf32, #tpu.memory_space<vmem>>, vector<80x256xf32>
      %cst_70 = arith.constant dense<0.000000e+00> : vector<8x256xf32>
      %134 = tpu.matmul %132, %133, %cst_70 {dimension_numbers = #tpu.dot_dimension_numbers<[1], [0], [0], [1], [0, 0, 1, 1], [], []>} : vector<8x80xf32>, vector<80x256xf32>, vector<8x256xf32> -> vector<8x256xf32>
      %c0_71 = arith.constant 0 : index
      %c0_72 = arith.constant 0 : index
      %c0_73 = arith.constant 0 : index
      %135 = vector.load %arg3[%c0_71, %c0_72, %c0_73] : memref<3x8x1xf32, #tpu.memory_space<vmem>>, vector<1x8x1xf32>
      %136 = vector.shape_cast %135 : vector<1x8x1xf32> to vector<8x1xf32>
      %137 = vector.broadcast %136 : vector<8x1xf32> to vector<8x256xf32>
      %138 = arith.addf %134, %137 : vector<8x256xf32>
      %cst_74 = arith.constant 0.000000e+00 : f32
      %139 = vector.broadcast %cst_74 : f32 to vector<8x256xf32>
      %140 = arith.maximumf %138, %139 : vector<8x256xf32>
      %c0_75 = arith.constant 0 : index
      %c0_76 = arith.constant 0 : index
      %c0_77 = arith.constant 0 : index
      %141 = vector.load %arg4[%c0_75, %c0_76, %c0_77] : memref<3x8x8xf32, #tpu.memory_space<vmem>>, vector<1x8x8xf32>
      %142 = vector.shape_cast %141 : vector<1x8x8xf32> to vector<8x8xf32>
      %cst_78 = arith.constant dense<0.000000e+00> : vector<8x256xf32>
      %143 = tpu.matmul %142, %140, %cst_78 {dimension_numbers = #tpu.dot_dimension_numbers<[1], [0], [0], [1], [0, 0, 1, 1], [], []>} : vector<8x8xf32>, vector<8x256xf32>, vector<8x256xf32> -> vector<8x256xf32>
      %c0_79 = arith.constant 0 : index
      %c0_80 = arith.constant 0 : index
      %c0_81 = arith.constant 0 : index
      %144 = vector.load %arg5[%c0_79, %c0_80, %c0_81] : memref<3x8x1xf32, #tpu.memory_space<vmem>>, vector<1x8x1xf32>
      %145 = vector.shape_cast %144 : vector<1x8x1xf32> to vector<8x1xf32>
      %146 = vector.broadcast %145 : vector<8x1xf32> to vector<8x256xf32>
      %147 = arith.addf %143, %146 : vector<8x256xf32>
      %cst_82 = arith.constant 0.000000e+00 : f32
      %148 = vector.broadcast %cst_82 : f32 to vector<8x256xf32>
      %149 = arith.maximumf %147, %148 : vector<8x256xf32>
      %c0_83 = arith.constant 0 : index
      %c0_84 = arith.constant 0 : index
      %c0_85 = arith.constant 0 : index
      %150 = vector.load %arg6[%c0_83, %c0_84, %c0_85] : memref<3x8x8xf32, #tpu.memory_space<vmem>>, vector<1x8x8xf32>
      %151 = vector.shape_cast %150 : vector<1x8x8xf32> to vector<8x8xf32>
      %cst_86 = arith.constant dense<0.000000e+00> : vector<8x256xf32>
      %152 = tpu.matmul %151, %149, %cst_86 {dimension_numbers = #tpu.dot_dimension_numbers<[1], [0], [0], [1], [0, 0, 1, 1], [], []>} : vector<8x8xf32>, vector<8x256xf32>, vector<8x256xf32> -> vector<8x256xf32>
      %c0_87 = arith.constant 0 : index
      %c0_88 = arith.constant 0 : index
      %c0_89 = arith.constant 0 : index
      %153 = vector.load %arg7[%c0_87, %c0_88, %c0_89] : memref<3x8x1xf32, #tpu.memory_space<vmem>>, vector<1x8x1xf32>
      %154 = vector.shape_cast %153 : vector<1x8x1xf32> to vector<8x1xf32>
      %155 = vector.broadcast %154 : vector<8x1xf32> to vector<8x256xf32>
      %156 = arith.addf %152, %155 : vector<8x256xf32>
      %cst_90 = arith.constant 0.000000e+00 : f32
      %157 = vector.broadcast %cst_90 : f32 to vector<8x256xf32>
      %158 = arith.maximumf %156, %157 : vector<8x256xf32>
      %c0_91 = arith.constant 0 : index
      %c0_92 = arith.constant 0 : index
      %c0_93 = arith.constant 0 : index
      %159 = vector.load %arg8[%c0_91, %c0_92, %c0_93] : memref<2x1x8xf32, #tpu.memory_space<vmem>>, vector<1x1x8xf32>
      %160 = vector.shape_cast %159 : vector<1x1x8xf32> to vector<1x8xf32>
      %cst_94 = arith.constant dense<0.000000e+00> : vector<1x256xf32>
      %161 = tpu.matmul %160, %158, %cst_94 {dimension_numbers = #tpu.dot_dimension_numbers<[1], [0], [0], [1], [0, 0, 1, 1], [], []>} : vector<1x8xf32>, vector<8x256xf32>, vector<1x256xf32> -> vector<1x256xf32>
      %c0_95 = arith.constant 0 : index
      %c0_96 = arith.constant 0 : index
      %c0_97 = arith.constant 0 : index
      %162 = vector.load %arg9[%c0_95, %c0_96, %c0_97] : memref<2x1x1xf32, #tpu.memory_space<vmem>>, vector<1x1x1xf32>
      %163 = vector.shape_cast %162 : vector<1x1x1xf32> to vector<1x1xf32>
      %164 = vector.broadcast %163 : vector<1x1xf32> to vector<1x256xf32>
      %165 = arith.addf %161, %164 : vector<1x256xf32>
      %166 = vector.shape_cast %165 : vector<1x256xf32> to vector<1x256xf32>
      %167 = vector.broadcast %166 : vector<1x256xf32> to vector<5x256xf32>
      %c1_i32_98 = arith.constant 1 : i32
      %168 = vector.broadcast %c1_i32_98 : i32 to vector<5x256xi32>
      %169 = arith.cmpi eq, %21, %168 : vector<5x256xi32>
      %c240_i32_99 = arith.constant 240 : i32
      %170 = tpu.dynamic_rotate %167 by %c240_i32_99 dim 1 : vector<5x256xf32>, i32 -> vector<5x256xf32>
      %171 = arith.select %169, %170, %167 : vector<5x256xi1>, vector<5x256xf32>
      %c2_i32_100 = arith.constant 2 : i32
      %172 = vector.broadcast %c2_i32_100 : i32 to vector<5x256xi32>
      %173 = arith.cmpi eq, %21, %172 : vector<5x256xi32>
      %c224_i32_101 = arith.constant 224 : i32
      %174 = tpu.dynamic_rotate %167 by %c224_i32_101 dim 1 : vector<5x256xf32>, i32 -> vector<5x256xf32>
      %175 = arith.select %173, %174, %171 : vector<5x256xi1>, vector<5x256xf32>
      %c3_i32_102 = arith.constant 3 : i32
      %176 = vector.broadcast %c3_i32_102 : i32 to vector<5x256xi32>
      %177 = arith.cmpi eq, %21, %176 : vector<5x256xi32>
      %c208_i32_103 = arith.constant 208 : i32
      %178 = tpu.dynamic_rotate %167 by %c208_i32_103 dim 1 : vector<5x256xf32>, i32 -> vector<5x256xf32>
      %179 = arith.select %177, %178, %175 : vector<5x256xi1>, vector<5x256xf32>
      %c4_i32_104 = arith.constant 4 : i32
      %180 = vector.broadcast %c4_i32_104 : i32 to vector<5x256xi32>
      %181 = arith.cmpi eq, %21, %180 : vector<5x256xi32>
      %c192_i32_105 = arith.constant 192 : i32
      %182 = tpu.dynamic_rotate %167 by %c192_i32_105 dim 1 : vector<5x256xf32>, i32 -> vector<5x256xf32>
      %183 = arith.select %181, %182, %179 : vector<5x256xi1>, vector<5x256xf32>
      %c0_106 = arith.constant 0 : index
      %c0_107 = arith.constant 0 : index
      %184 = vector.load %arg15[%c0_106, %c0_107] : memref<80x256xf32, #tpu.memory_space<vmem>>, vector<5x256xf32>
      tpu.vector_store %arg15[%c0_106, %c0_107], %183 {strides = array<i32>} : memref<80x256xf32, #tpu.memory_space<vmem>>, vector<5x256xf32>,
      %c255_i32_108 = arith.constant 255 : i32
      %185 = tpu.dynamic_rotate %183 by %c255_i32_108 dim 1 : vector<5x256xf32>, i32 -> vector<5x256xf32>
      %c15_i32_109 = arith.constant 15 : i32
      %186 = tpu.dynamic_rotate %183 by %c15_i32_109 dim 1 : vector<5x256xf32>, i32 -> vector<5x256xf32>
      %c15_i32_110 = arith.constant 15 : i32
      %187 = vector.broadcast %c15_i32_110 : i32 to vector<5x256xi32>
      %188 = arith.cmpi slt, %20, %187 : vector<5x256xi32>
      %189 = arith.select %188, %185, %186 : vector<5x256xi1>, vector<5x256xf32>
      %c8_111 = arith.constant 8 : index
      %c0_112 = arith.constant 0 : index
      %190 = vector.load %arg15[%c8_111, %c0_112] : memref<80x256xf32, #tpu.memory_space<vmem>>, vector<5x256xf32>
      tpu.vector_store %arg15[%c8_111, %c0_112], %189 {strides = array<i32>} : memref<80x256xf32, #tpu.memory_space<vmem>>, vector<5x256xf32>,
      %c254_i32_113 = arith.constant 254 : i32
      %191 = tpu.dynamic_rotate %183 by %c254_i32_113 dim 1 : vector<5x256xf32>, i32 -> vector<5x256xf32>
      %c14_i32_114 = arith.constant 14 : i32
      %192 = tpu.dynamic_rotate %183 by %c14_i32_114 dim 1 : vector<5x256xf32>, i32 -> vector<5x256xf32>
      %c14_i32_115 = arith.constant 14 : i32
      %193 = vector.broadcast %c14_i32_115 : i32 to vector<5x256xi32>
      %194 = arith.cmpi slt, %20, %193 : vector<5x256xi32>
      %195 = arith.select %194, %191, %192 : vector<5x256xi1>, vector<5x256xf32>
      %c16_116 = arith.constant 16 : index
      %c0_117 = arith.constant 0 : index
      %196 = vector.load %arg15[%c16_116, %c0_117] : memref<80x256xf32, #tpu.memory_space<vmem>>, vector<5x256xf32>
      tpu.vector_store %arg15[%c16_116, %c0_117], %195 {strides = array<i32>} : memref<80x256xf32, #tpu.memory_space<vmem>>, vector<5x256xf32>,
      %c253_i32_118 = arith.constant 253 : i32
      %197 = tpu.dynamic_rotate %183 by %c253_i32_118 dim 1 : vector<5x256xf32>, i32 -> vector<5x256xf32>
      %c13_i32_119 = arith.constant 13 : i32
      %198 = tpu.dynamic_rotate %183 by %c13_i32_119 dim 1 : vector<5x256xf32>, i32 -> vector<5x256xf32>
      %c13_i32_120 = arith.constant 13 : i32
      %199 = vector.broadcast %c13_i32_120 : i32 to vector<5x256xi32>
      %200 = arith.cmpi slt, %20, %199 : vector<5x256xi32>
      %201 = arith.select %200, %197, %198 : vector<5x256xi1>, vector<5x256xf32>
      %c24_121 = arith.constant 24 : index
      %c0_122 = arith.constant 0 : index
      %202 = vector.load %arg15[%c24_121, %c0_122] : memref<80x256xf32, #tpu.memory_space<vmem>>, vector<5x256xf32>
      tpu.vector_store %arg15[%c24_121, %c0_122], %201 {strides = array<i32>} : memref<80x256xf32, #tpu.memory_space<vmem>>, vector<5x256xf32>,
      %c252_i32_123 = arith.constant 252 : i32
      %203 = tpu.dynamic_rotate %183 by %c252_i32_123 dim 1 : vector<5x256xf32>, i32 -> vector<5x256xf32>
      %c12_i32_124 = arith.constant 12 : i32
      %204 = tpu.dynamic_rotate %183 by %c12_i32_124 dim 1 : vector<5x256xf32>, i32 -> vector<5x256xf32>
      %c12_i32_125 = arith.constant 12 : i32
      %205 = vector.broadcast %c12_i32_125 : i32 to vector<5x256xi32>
      %206 = arith.cmpi slt, %20, %205 : vector<5x256xi32>
      %207 = arith.select %206, %203, %204 : vector<5x256xi1>, vector<5x256xf32>
      %c32_126 = arith.constant 32 : index
      %c0_127 = arith.constant 0 : index
      %208 = vector.load %arg15[%c32_126, %c0_127] : memref<80x256xf32, #tpu.memory_space<vmem>>, vector<5x256xf32>
      tpu.vector_store %arg15[%c32_126, %c0_127], %207 {strides = array<i32>} : memref<80x256xf32, #tpu.memory_space<vmem>>, vector<5x256xf32>,
      %c1 = arith.constant 1 : index
      %c0_128 = arith.constant 0 : index
      %c0_129 = arith.constant 0 : index
      %209 = vector.load %arg2[%c1, %c0_128, %c0_129] : memref<3x8x80xf32, #tpu.memory_space<vmem>>, vector<1x8x80xf32>
      %210 = vector.shape_cast %209 : vector<1x8x80xf32> to vector<8x80xf32>
      %c0_130 = arith.constant 0 : index
      %c0_131 = arith.constant 0 : index
      %211 = vector.load %arg15[%c0_130, %c0_131] : memref<80x256xf32, #tpu.memory_space<vmem>>, vector<80x256xf32>
      %cst_132 = arith.constant dense<0.000000e+00> : vector<8x256xf32>
      %212 = tpu.matmul %210, %211, %cst_132 {dimension_numbers = #tpu.dot_dimension_numbers<[1], [0], [0], [1], [0, 0, 1, 1], [], []>} : vector<8x80xf32>, vector<80x256xf32>, vector<8x256xf32> -> vector<8x256xf32>
      %c1_133 = arith.constant 1 : index
      %c0_134 = arith.constant 0 : index
      %c0_135 = arith.constant 0 : index
      %213 = vector.load %arg3[%c1_133, %c0_134, %c0_135] : memref<3x8x1xf32, #tpu.memory_space<vmem>>, vector<1x8x1xf32>
      %214 = vector.shape_cast %213 : vector<1x8x1xf32> to vector<8x1xf32>
      %215 = vector.broadcast %214 : vector<8x1xf32> to vector<8x256xf32>
      %216 = arith.addf %212, %215 : vector<8x256xf32>
      %cst_136 = arith.constant 0.000000e+00 : f32
      %217 = vector.broadcast %cst_136 : f32 to vector<8x256xf32>
      %218 = arith.maximumf %216, %217 : vector<8x256xf32>
      %c1_137 = arith.constant 1 : index
      %c0_138 = arith.constant 0 : index
      %c0_139 = arith.constant 0 : index
      %219 = vector.load %arg4[%c1_137, %c0_138, %c0_139] : memref<3x8x8xf32, #tpu.memory_space<vmem>>, vector<1x8x8xf32>
      %220 = vector.shape_cast %219 : vector<1x8x8xf32> to vector<8x8xf32>
      %cst_140 = arith.constant dense<0.000000e+00> : vector<8x256xf32>
      %221 = tpu.matmul %220, %218, %cst_140 {dimension_numbers = #tpu.dot_dimension_numbers<[1], [0], [0], [1], [0, 0, 1, 1], [], []>} : vector<8x8xf32>, vector<8x256xf32>, vector<8x256xf32> -> vector<8x256xf32>
      %c1_141 = arith.constant 1 : index
      %c0_142 = arith.constant 0 : index
      %c0_143 = arith.constant 0 : index
      %222 = vector.load %arg5[%c1_141, %c0_142, %c0_143] : memref<3x8x1xf32, #tpu.memory_space<vmem>>, vector<1x8x1xf32>
      %223 = vector.shape_cast %222 : vector<1x8x1xf32> to vector<8x1xf32>
      %224 = vector.broadcast %223 : vector<8x1xf32> to vector<8x256xf32>
      %225 = arith.addf %221, %224 : vector<8x256xf32>
      %cst_144 = arith.constant 0.000000e+00 : f32
      %226 = vector.broadcast %cst_144 : f32 to vector<8x256xf32>
      %227 = arith.maximumf %225, %226 : vector<8x256xf32>
      %c1_145 = arith.constant 1 : index
      %c0_146 = arith.constant 0 : index
      %c0_147 = arith.constant 0 : index
      %228 = vector.load %arg6[%c1_145, %c0_146, %c0_147] : memref<3x8x8xf32, #tpu.memory_space<vmem>>, vector<1x8x8xf32>
      %229 = vector.shape_cast %228 : vector<1x8x8xf32> to vector<8x8xf32>
      %cst_148 = arith.constant dense<0.000000e+00> : vector<8x256xf32>
      %230 = tpu.matmul %229, %227, %cst_148 {dimension_numbers = #tpu.dot_dimension_numbers<[1], [0], [0], [1], [0, 0, 1, 1], [], []>} : vector<8x8xf32>, vector<8x256xf32>, vector<8x256xf32> -> vector<8x256xf32>
      %c1_149 = arith.constant 1 : index
      %c0_150 = arith.constant 0 : index
      %c0_151 = arith.constant 0 : index
      %231 = vector.load %arg7[%c1_149, %c0_150, %c0_151] : memref<3x8x1xf32, #tpu.memory_space<vmem>>, vector<1x8x1xf32>
      %232 = vector.shape_cast %231 : vector<1x8x1xf32> to vector<8x1xf32>
      %233 = vector.broadcast %232 : vector<8x1xf32> to vector<8x256xf32>
      %234 = arith.addf %230, %233 : vector<8x256xf32>
      %cst_152 = arith.constant 0.000000e+00 : f32
      %235 = vector.broadcast %cst_152 : f32 to vector<8x256xf32>
      %236 = arith.maximumf %234, %235 : vector<8x256xf32>
      %c1_153 = arith.constant 1 : index
      %c0_154 = arith.constant 0 : index
      %c0_155 = arith.constant 0 : index
      %237 = vector.load %arg8[%c1_153, %c0_154, %c0_155] : memref<2x1x8xf32, #tpu.memory_space<vmem>>, vector<1x1x8xf32>
      %238 = vector.shape_cast %237 : vector<1x1x8xf32> to vector<1x8xf32>
      %cst_156 = arith.constant dense<0.000000e+00> : vector<1x256xf32>
      %239 = tpu.matmul %238, %236, %cst_156 {dimension_numbers = #tpu.dot_dimension_numbers<[1], [0], [0], [1], [0, 0, 1, 1], [], []>} : vector<1x8xf32>, vector<8x256xf32>, vector<1x256xf32> -> vector<1x256xf32>
      %c1_157 = arith.constant 1 : index
      %c0_158 = arith.constant 0 : index
      %c0_159 = arith.constant 0 : index
      %240 = vector.load %arg9[%c1_157, %c0_158, %c0_159] : memref<2x1x1xf32, #tpu.memory_space<vmem>>, vector<1x1x1xf32>
      %241 = vector.shape_cast %240 : vector<1x1x1xf32> to vector<1x1xf32>
      %242 = vector.broadcast %241 : vector<1x1xf32> to vector<1x256xf32>
      %243 = arith.addf %239, %242 : vector<1x256xf32>
      %244 = vector.shape_cast %243 : vector<1x256xf32> to vector<1x256xf32>
      %245 = vector.broadcast %244 : vector<1x256xf32> to vector<5x256xf32>
      %c1_i32_160 = arith.constant 1 : i32
      %246 = vector.broadcast %c1_i32_160 : i32 to vector<5x256xi32>
      %247 = arith.cmpi eq, %21, %246 : vector<5x256xi32>
      %c240_i32_161 = arith.constant 240 : i32
      %248 = tpu.dynamic_rotate %245 by %c240_i32_161 dim 1 : vector<5x256xf32>, i32 -> vector<5x256xf32>
      %249 = arith.select %247, %248, %245 : vector<5x256xi1>, vector<5x256xf32>
      %c2_i32_162 = arith.constant 2 : i32
      %250 = vector.broadcast %c2_i32_162 : i32 to vector<5x256xi32>
      %251 = arith.cmpi eq, %21, %250 : vector<5x256xi32>
      %c224_i32_163 = arith.constant 224 : i32
      %252 = tpu.dynamic_rotate %245 by %c224_i32_163 dim 1 : vector<5x256xf32>, i32 -> vector<5x256xf32>
      %253 = arith.select %251, %252, %249 : vector<5x256xi1>, vector<5x256xf32>
      %c3_i32_164 = arith.constant 3 : i32
      %254 = vector.broadcast %c3_i32_164 : i32 to vector<5x256xi32>
      %255 = arith.cmpi eq, %21, %254 : vector<5x256xi32>
      %c208_i32_165 = arith.constant 208 : i32
      %256 = tpu.dynamic_rotate %245 by %c208_i32_165 dim 1 : vector<5x256xf32>, i32 -> vector<5x256xf32>
      %257 = arith.select %255, %256, %253 : vector<5x256xi1>, vector<5x256xf32>
      %c4_i32_166 = arith.constant 4 : i32
      %258 = vector.broadcast %c4_i32_166 : i32 to vector<5x256xi32>
      %259 = arith.cmpi eq, %21, %258 : vector<5x256xi32>
      %c192_i32_167 = arith.constant 192 : i32
      %260 = tpu.dynamic_rotate %245 by %c192_i32_167 dim 1 : vector<5x256xf32>, i32 -> vector<5x256xf32>
      %261 = arith.select %259, %260, %257 : vector<5x256xi1>, vector<5x256xf32>
      %c0_168 = arith.constant 0 : index
      %c0_169 = arith.constant 0 : index
      %262 = vector.load %arg15[%c0_168, %c0_169] : memref<80x256xf32, #tpu.memory_space<vmem>>, vector<5x256xf32>
      tpu.vector_store %arg15[%c0_168, %c0_169], %261 {strides = array<i32>} : memref<80x256xf32, #tpu.memory_space<vmem>>, vector<5x256xf32>,
      %c255_i32_170 = arith.constant 255 : i32
      %263 = tpu.dynamic_rotate %261 by %c255_i32_170 dim 1 : vector<5x256xf32>, i32 -> vector<5x256xf32>
      %c15_i32_171 = arith.constant 15 : i32
      %264 = tpu.dynamic_rotate %261 by %c15_i32_171 dim 1 : vector<5x256xf32>, i32 -> vector<5x256xf32>
      %c15_i32_172 = arith.constant 15 : i32
      %265 = vector.broadcast %c15_i32_172 : i32 to vector<5x256xi32>
      %266 = arith.cmpi slt, %20, %265 : vector<5x256xi32>
      %267 = arith.select %266, %263, %264 : vector<5x256xi1>, vector<5x256xf32>
      %c8_173 = arith.constant 8 : index
      %c0_174 = arith.constant 0 : index
      %268 = vector.load %arg15[%c8_173, %c0_174] : memref<80x256xf32, #tpu.memory_space<vmem>>, vector<5x256xf32>
      tpu.vector_store %arg15[%c8_173, %c0_174], %267 {strides = array<i32>} : memref<80x256xf32, #tpu.memory_space<vmem>>, vector<5x256xf32>,
      %c254_i32_175 = arith.constant 254 : i32
      %269 = tpu.dynamic_rotate %261 by %c254_i32_175 dim 1 : vector<5x256xf32>, i32 -> vector<5x256xf32>
      %c14_i32_176 = arith.constant 14 : i32
      %270 = tpu.dynamic_rotate %261 by %c14_i32_176 dim 1 : vector<5x256xf32>, i32 -> vector<5x256xf32>
      %c14_i32_177 = arith.constant 14 : i32
      %271 = vector.broadcast %c14_i32_177 : i32 to vector<5x256xi32>
      %272 = arith.cmpi slt, %20, %271 : vector<5x256xi32>
      %273 = arith.select %272, %269, %270 : vector<5x256xi1>, vector<5x256xf32>
      %c16_178 = arith.constant 16 : index
      %c0_179 = arith.constant 0 : index
      %274 = vector.load %arg15[%c16_178, %c0_179] : memref<80x256xf32, #tpu.memory_space<vmem>>, vector<5x256xf32>
      tpu.vector_store %arg15[%c16_178, %c0_179], %273 {strides = array<i32>} : memref<80x256xf32, #tpu.memory_space<vmem>>, vector<5x256xf32>,
      %c253_i32_180 = arith.constant 253 : i32
      %275 = tpu.dynamic_rotate %261 by %c253_i32_180 dim 1 : vector<5x256xf32>, i32 -> vector<5x256xf32>
      %c13_i32_181 = arith.constant 13 : i32
      %276 = tpu.dynamic_rotate %261 by %c13_i32_181 dim 1 : vector<5x256xf32>, i32 -> vector<5x256xf32>
      %c13_i32_182 = arith.constant 13 : i32
      %277 = vector.broadcast %c13_i32_182 : i32 to vector<5x256xi32>
      %278 = arith.cmpi slt, %20, %277 : vector<5x256xi32>
      %279 = arith.select %278, %275, %276 : vector<5x256xi1>, vector<5x256xf32>
      %c24_183 = arith.constant 24 : index
      %c0_184 = arith.constant 0 : index
      %280 = vector.load %arg15[%c24_183, %c0_184] : memref<80x256xf32, #tpu.memory_space<vmem>>, vector<5x256xf32>
      tpu.vector_store %arg15[%c24_183, %c0_184], %279 {strides = array<i32>} : memref<80x256xf32, #tpu.memory_space<vmem>>, vector<5x256xf32>,
      %c252_i32_185 = arith.constant 252 : i32
      %281 = tpu.dynamic_rotate %261 by %c252_i32_185 dim 1 : vector<5x256xf32>, i32 -> vector<5x256xf32>
      %c12_i32_186 = arith.constant 12 : i32
      %282 = tpu.dynamic_rotate %261 by %c12_i32_186 dim 1 : vector<5x256xf32>, i32 -> vector<5x256xf32>
      %c12_i32_187 = arith.constant 12 : i32
      %283 = vector.broadcast %c12_i32_187 : i32 to vector<5x256xi32>
      %284 = arith.cmpi slt, %20, %283 : vector<5x256xi32>
      %285 = arith.select %284, %281, %282 : vector<5x256xi1>, vector<5x256xf32>
      %c32_188 = arith.constant 32 : index
      %c0_189 = arith.constant 0 : index
      %286 = vector.load %arg15[%c32_188, %c0_189] : memref<80x256xf32, #tpu.memory_space<vmem>>, vector<5x256xf32>
      tpu.vector_store %arg15[%c32_188, %c0_189], %285 {strides = array<i32>} : memref<80x256xf32, #tpu.memory_space<vmem>>, vector<5x256xf32>,
      %c2 = arith.constant 2 : index
      %c0_190 = arith.constant 0 : index
      %c0_191 = arith.constant 0 : index
      %287 = vector.load %arg2[%c2, %c0_190, %c0_191] : memref<3x8x80xf32, #tpu.memory_space<vmem>>, vector<1x8x80xf32>
      %288 = vector.shape_cast %287 : vector<1x8x80xf32> to vector<8x80xf32>
      %c0_192 = arith.constant 0 : index
      %c0_193 = arith.constant 0 : index
      %289 = vector.load %arg15[%c0_192, %c0_193] : memref<80x256xf32, #tpu.memory_space<vmem>>, vector<80x256xf32>
      %cst_194 = arith.constant dense<0.000000e+00> : vector<8x256xf32>
      %290 = tpu.matmul %288, %289, %cst_194 {dimension_numbers = #tpu.dot_dimension_numbers<[1], [0], [0], [1], [0, 0, 1, 1], [], []>} : vector<8x80xf32>, vector<80x256xf32>, vector<8x256xf32> -> vector<8x256xf32>
      %c2_195 = arith.constant 2 : index
      %c0_196 = arith.constant 0 : index
      %c0_197 = arith.constant 0 : index
      %291 = vector.load %arg3[%c2_195, %c0_196, %c0_197] : memref<3x8x1xf32, #tpu.memory_space<vmem>>, vector<1x8x1xf32>
      %292 = vector.shape_cast %291 : vector<1x8x1xf32> to vector<8x1xf32>
      %293 = vector.broadcast %292 : vector<8x1xf32> to vector<8x256xf32>
      %294 = arith.addf %290, %293 : vector<8x256xf32>
      %cst_198 = arith.constant 0.000000e+00 : f32
      %295 = vector.broadcast %cst_198 : f32 to vector<8x256xf32>
      %296 = arith.maximumf %294, %295 : vector<8x256xf32>
      %c2_199 = arith.constant 2 : index
      %c0_200 = arith.constant 0 : index
      %c0_201 = arith.constant 0 : index
      %297 = vector.load %arg4[%c2_199, %c0_200, %c0_201] : memref<3x8x8xf32, #tpu.memory_space<vmem>>, vector<1x8x8xf32>
      %298 = vector.shape_cast %297 : vector<1x8x8xf32> to vector<8x8xf32>
      %cst_202 = arith.constant dense<0.000000e+00> : vector<8x256xf32>
      %299 = tpu.matmul %298, %296, %cst_202 {dimension_numbers = #tpu.dot_dimension_numbers<[1], [0], [0], [1], [0, 0, 1, 1], [], []>} : vector<8x8xf32>, vector<8x256xf32>, vector<8x256xf32> -> vector<8x256xf32>
      %c2_203 = arith.constant 2 : index
      %c0_204 = arith.constant 0 : index
      %c0_205 = arith.constant 0 : index
      %300 = vector.load %arg5[%c2_203, %c0_204, %c0_205] : memref<3x8x1xf32, #tpu.memory_space<vmem>>, vector<1x8x1xf32>
      %301 = vector.shape_cast %300 : vector<1x8x1xf32> to vector<8x1xf32>
      %302 = vector.broadcast %301 : vector<8x1xf32> to vector<8x256xf32>
      %303 = arith.addf %299, %302 : vector<8x256xf32>
      %cst_206 = arith.constant 0.000000e+00 : f32
      %304 = vector.broadcast %cst_206 : f32 to vector<8x256xf32>
      %305 = arith.maximumf %303, %304 : vector<8x256xf32>
      %c2_207 = arith.constant 2 : index
      %c0_208 = arith.constant 0 : index
      %c0_209 = arith.constant 0 : index
      %306 = vector.load %arg6[%c2_207, %c0_208, %c0_209] : memref<3x8x8xf32, #tpu.memory_space<vmem>>, vector<1x8x8xf32>
      %307 = vector.shape_cast %306 : vector<1x8x8xf32> to vector<8x8xf32>
      %cst_210 = arith.constant dense<0.000000e+00> : vector<8x256xf32>
      %308 = tpu.matmul %307, %305, %cst_210 {dimension_numbers = #tpu.dot_dimension_numbers<[1], [0], [0], [1], [0, 0, 1, 1], [], []>} : vector<8x8xf32>, vector<8x256xf32>, vector<8x256xf32> -> vector<8x256xf32>
      %c2_211 = arith.constant 2 : index
      %c0_212 = arith.constant 0 : index
      %c0_213 = arith.constant 0 : index
      %309 = vector.load %arg7[%c2_211, %c0_212, %c0_213] : memref<3x8x1xf32, #tpu.memory_space<vmem>>, vector<1x8x1xf32>
      %310 = vector.shape_cast %309 : vector<1x8x1xf32> to vector<8x1xf32>
      %311 = vector.broadcast %310 : vector<8x1xf32> to vector<8x256xf32>
      %312 = arith.addf %308, %311 : vector<8x256xf32>
      %cst_214 = arith.constant 0.000000e+00 : f32
      %313 = vector.broadcast %cst_214 : f32 to vector<8x256xf32>
      %314 = arith.maximumf %312, %313 : vector<8x256xf32>
      %cst_215 = arith.constant dense<0.000000e+00> : vector<8xf32>
      %315 = vector.multi_reduction <add>, %314, %cst_215 [1] : vector<8x256xf32> to vector<8xf32>
      %316 = vector.shape_cast %315 : vector<8xf32> to vector<8x1xf32>
      %317 = vector.broadcast %arg17 : i32 to vector<8x4xi32>
      %318 = arith.cmpi eq, %22, %317 : vector<8x4xi32>
      %c0_216 = arith.constant 0 : index
      %c0_217 = arith.constant 0 : index
      %319 = vector.load %arg16[%c0_216, %c0_217] : memref<8x4xf32, #tpu.memory_space<vmem>>, vector<8x4xf32>
      %320 = vector.shape_cast %316 : vector<8x1xf32> to vector<8x1xf32>
      %321 = vector.broadcast %320 : vector<8x1xf32> to vector<8x4xf32>
      %322 = arith.select %318, %321, %319 : vector<8x4xi1>, vector<8x4xf32>
      %c0_218 = arith.constant 0 : index
      %c0_219 = arith.constant 0 : index
      %323 = vector.load %arg16[%c0_218, %c0_219] : memref<8x4xf32, #tpu.memory_space<vmem>>, vector<8x4xf32>
      tpu.vector_store %arg16[%c0_218, %c0_219], %322 {strides = array<i32>} : memref<8x4xf32, #tpu.memory_space<vmem>>, vector<8x4xf32>,
    }
    %c4_i32_9 = arith.constant 4 : i32
    %c0_10 = arith.constant 0 : index
    %c0_11 = arith.constant 0 : index
    %24 = vector.load %arg10[%c0_10, %c0_11] : memref<8x8xf32, #tpu.memory_space<vmem>>, vector<8x8xf32>
    %c0_12 = arith.constant 0 : index
    %c0_13 = arith.constant 0 : index
    %25 = vector.load %arg16[%c0_12, %c0_13] : memref<8x4xf32, #tpu.memory_space<vmem>>, vector<8x4xf32>
    %cst_14 = arith.constant dense<0.000000e+00> : vector<8x4xf32>
    %26 = tpu.matmul %24, %25, %cst_14 {dimension_numbers = #tpu.dot_dimension_numbers<[1], [0], [0], [1], [0, 0, 1, 1], [], []>} : vector<8x8xf32>, vector<8x4xf32>, vector<8x4xf32> -> vector<8x4xf32>
    %c0_15 = arith.constant 0 : index
    %c0_16 = arith.constant 0 : index
    %27 = vector.load %arg11[%c0_15, %c0_16] : memref<8x1xf32, #tpu.memory_space<vmem>>, vector<8x1xf32>
    %28 = vector.broadcast %27 : vector<8x1xf32> to vector<8x4xf32>
    %29 = arith.addf %26, %28 : vector<8x4xf32>
    %cst_17 = arith.constant 0.000000e+00 : f32
    %30 = vector.broadcast %cst_17 : f32 to vector<8x4xf32>
    %31 = arith.maximumf %29, %30 : vector<8x4xf32>
    %c0_18 = arith.constant 0 : index
    %c0_19 = arith.constant 0 : index
    %32 = vector.load %arg12[%c0_18, %c0_19] : memref<1x8xf32, #tpu.memory_space<vmem>>, vector<1x8xf32>
    %cst_20 = arith.constant dense<0.000000e+00> : vector<1x4xf32>
    %33 = tpu.matmul %32, %31, %cst_20 {dimension_numbers = #tpu.dot_dimension_numbers<[1], [0], [0], [1], [0, 0, 1, 1], [], []>} : vector<1x8xf32>, vector<8x4xf32>, vector<1x4xf32> -> vector<1x4xf32>
    %c0_21 = arith.constant 0 : index
    %c0_22 = arith.constant 0 : index
    %34 = vector.load %arg13[%c0_21, %c0_22] : memref<1x1xf32, #tpu.memory_space<vmem>>, vector<1x1xf32>
    %35 = vector.broadcast %34 : vector<1x1xf32> to vector<1x4xf32>
    %36 = arith.addf %33, %35 : vector<1x4xf32>
    %c0_23 = arith.constant 0 : index
    %c0_24 = arith.constant 0 : index
    %c0_25 = arith.constant 0 : index
    %37 = vector.load %arg14[%c0_23, %c0_24, %c0_25] : memref<1x1x4xf32, #tpu.memory_space<vmem>>, vector<1x1x4xf32>
    %38 = vector.shape_cast %37 : vector<1x1x4xf32> to vector<1x4xf32>
    %39 = vector.shape_cast %36 : vector<1x4xf32> to vector<1x1x4xf32>
    tpu.vector_store %arg14[%c0_23, %c0_24, %c0_25], %39 {strides = array<i32>} : memref<1x1x4xf32, #tpu.memory_space<vmem>>, vector<1x1x4xf32>,
    return
  }
  func.func @transform_0(%arg0: i32) -> (i32, i32, i32) {
    %c0_i32 = arith.constant 0 : i32
    %c0_i32_0 = arith.constant 0 : i32
    %c0_i32_1 = arith.constant 0 : i32
    return %arg0, %c0_i32, %c0_i32_0 : i32, i32, i32
  }
  func.func @transform_1(%arg0: i32) -> (i32, i32, i32) {
    %c0_i32 = arith.constant 0 : i32
    %c0_i32_0 = arith.constant 0 : i32
    %c0_i32_1 = arith.constant 0 : i32
    %c0_i32_2 = arith.constant 0 : i32
    return %c0_i32, %c0_i32_0, %c0_i32_1 : i32, i32, i32
  }
  func.func @transform_2(%arg0: i32) -> (i32, i32, i32) {
    %c0_i32 = arith.constant 0 : i32
    %c0_i32_0 = arith.constant 0 : i32
    %c0_i32_1 = arith.constant 0 : i32
    %c0_i32_2 = arith.constant 0 : i32
    return %c0_i32, %c0_i32_0, %c0_i32_1 : i32, i32, i32
  }
  func.func @transform_3(%arg0: i32) -> (i32, i32, i32) {
    %c0_i32 = arith.constant 0 : i32
    %c0_i32_0 = arith.constant 0 : i32
    %c0_i32_1 = arith.constant 0 : i32
    %c0_i32_2 = arith.constant 0 : i32
    return %c0_i32, %c0_i32_0, %c0_i32_1 : i32, i32, i32
  }
  func.func @transform_4(%arg0: i32) -> (i32, i32, i32) {
    %c0_i32 = arith.constant 0 : i32
    %c0_i32_0 = arith.constant 0 : i32
    %c0_i32_1 = arith.constant 0 : i32
    %c0_i32_2 = arith.constant 0 : i32
    return %c0_i32, %c0_i32_0, %c0_i32_1 : i32, i32, i32
  }
  func.func @transform_5(%arg0: i32) -> (i32, i32, i32) {
    %c0_i32 = arith.constant 0 : i32
    %c0_i32_0 = arith.constant 0 : i32
    %c0_i32_1 = arith.constant 0 : i32
    %c0_i32_2 = arith.constant 0 : i32
    return %c0_i32, %c0_i32_0, %c0_i32_1 : i32, i32, i32
  }
  func.func @transform_6(%arg0: i32) -> (i32, i32, i32) {
    %c0_i32 = arith.constant 0 : i32
    %c0_i32_0 = arith.constant 0 : i32
    %c0_i32_1 = arith.constant 0 : i32
    %c0_i32_2 = arith.constant 0 : i32
    return %c0_i32, %c0_i32_0, %c0_i32_1 : i32, i32, i32
  }
  func.func @transform_7(%arg0: i32) -> (i32, i32, i32) {
    %c0_i32 = arith.constant 0 : i32
    %c0_i32_0 = arith.constant 0 : i32
    %c0_i32_1 = arith.constant 0 : i32
    %c0_i32_2 = arith.constant 0 : i32
    return %c0_i32, %c0_i32_0, %c0_i32_1 : i32, i32, i32
  }
  func.func @transform_8(%arg0: i32) -> (i32, i32, i32) {
    %c0_i32 = arith.constant 0 : i32
    %c0_i32_0 = arith.constant 0 : i32
    %c0_i32_1 = arith.constant 0 : i32
    %c0_i32_2 = arith.constant 0 : i32
    return %c0_i32, %c0_i32_0, %c0_i32_1 : i32, i32, i32
  }
  func.func @transform_9(%arg0: i32) -> (i32, i32) {
    %c0_i32 = arith.constant 0 : i32
    %c0_i32_0 = arith.constant 0 : i32
    %c0_i32_1 = arith.constant 0 : i32
    return %c0_i32, %c0_i32_0 : i32, i32
  }
  func.func @transform_10(%arg0: i32) -> (i32, i32) {
    %c0_i32 = arith.constant 0 : i32
    %c0_i32_0 = arith.constant 0 : i32
    %c0_i32_1 = arith.constant 0 : i32
    return %c0_i32, %c0_i32_0 : i32, i32
  }
  func.func @transform_11(%arg0: i32) -> (i32, i32) {
    %c0_i32 = arith.constant 0 : i32
    %c0_i32_0 = arith.constant 0 : i32
    %c0_i32_1 = arith.constant 0 : i32
    return %c0_i32, %c0_i32_0 : i32, i32
  }
  func.func @transform_12(%arg0: i32) -> (i32, i32) {
    %c0_i32 = arith.constant 0 : i32
    %c0_i32_0 = arith.constant 0 : i32
    %c0_i32_1 = arith.constant 0 : i32
    return %c0_i32, %c0_i32_0 : i32, i32
  }
  func.func @transform_13(%arg0: i32) -> (i32, i32, i32) {
    %c0_i32 = arith.constant 0 : i32
    %c0_i32_0 = arith.constant 0 : i32
    %c0_i32_1 = arith.constant 0 : i32
    return %arg0, %c0_i32, %c0_i32_0 : i32, i32, i32
  }
}

</mosaic_0001>

<llo_original>
// kernel: tpu_custom_call.1
$region0: #{tpu_custom_call.1}
  #allocation0 [shape = 'u32[]', space=smem, size = 0x4, offset = 0x4, fixed_abs, tag = 'smem constant byte address 0x4 - core index']
  #allocation1 [shape = 'u32[72,128]{1,0:T(1,128)}', space=vmem, size = 0x9000, scoped, tag = 'internal scratch']
  #allocation2 [shape = 'f32[80,256]{1,0:T(8,128)}', space=vmem, size = 0x14000, scoped, tag = 'scratch operand']
  #allocation3 [shape = 'f32[8,4]{1,0:T(8,128)}', space=vmem, size = 0x1000, scoped, tag = 'scratch operand']
  #allocation4 [shape = 'f32[1,1]{1,0:T(1,128)S(1)}', space=vmem, size = 0x200, scoped, tag = 'scoped memory for tpu_custom_call.1']
  %s0 = inlined_call_operand.vmem [shape: f32[8,2,256], index: 0, kind: input, shape index: {}]
  %s1 = inlined_call_operand.vmem [shape: f32[3,8,80], index: 1, kind: input, shape index: {}]
  %s2 = inlined_call_operand.vmem [shape: f32[3,8,1], index: 2, kind: input, shape index: {}]
  %s3 = inlined_call_operand.vmem [shape: f32[3,8,8], index: 3, kind: input, shape index: {}]
  %s4 = inlined_call_operand.vmem [shape: f32[3,8,1], index: 4, kind: input, shape index: {}]
  %s5 = inlined_call_operand.hbm [shape: f32[3,8,8], index: 5, kind: input, shape index: {}]
  %s6 = inlined_call_operand.vmem [shape: f32[3,8,1], index: 6, kind: input, shape index: {}]
  %s7 = inlined_call_operand.vmem [shape: f32[2,1,8], index: 7, kind: input, shape index: {}]
  %s8 = inlined_call_operand.vmem [shape: f32[2,1,1], index: 8, kind: input, shape index: {}]
  %s9 = inlined_call_operand.vmem [shape: f32[8,8], index: 9, kind: input, shape index: {}]
  %s10 = inlined_call_operand.vmem [shape: f32[8,1], index: 10, kind: input, shape index: {}]
  %s11 = inlined_call_operand.vmem [shape: f32[1,8], index: 11, kind: input, shape index: {}]
  %s12 = inlined_call_operand.<no memory space> [shape: f32[1,1], index: 12, kind: input, shape index: {}]
  %s13 = inlined_call_operand.hbm [shape: f32[2,1,4], index: 13, kind: output, shape index: {}]
  %s14 = sld [smem:[#allocation0]]
  $region96: #{tpu_custom_call.1} parent=0
    _
  %s16 = ssub.s32 1, %s14
  %s17 = scalar_select 0, %s16, %s14
  %v18 = vstv %s12
  %19 = vst [vmem:[#allocation4] sm:$0x1] %v18
  $region1: #{tpu_custom_call.1} parent=0
    #allocation5 [shape = 'u8[12288]{0}', space=vmem, size = 0x3000, scoped, tag = 'input window, operand 5, single buffered']
    #allocation6 [shape = 's32[2]{0}', space=sflag, size = 0x8, scoped, tag = 'scoped memory for tpu_custom_call.1']
    #allocation7 [shape = 's32[2]{0}', space=sflag, size = 0x8, scoped, tag = 'scoped memory for tpu_custom_call.1']
    #allocation8 [shape = 'u8[1024]{0}', space=vmem, size = 0x400, scoped, tag = 'output window, operand 0']
    %20 = vsyncpa [#allocation6], 0
    %21 = vsyncpa [#allocation7], 0
    %s22 = scalar_lea.sflag [#allocation7], 1
    %23 = vsyncpa %s22, 0
    loop: start=0, step=1, limit=4
    $region2: #{tpu_custom_call.1} parent=1 // loop_pre_header
      _
    $region3: #{tpu_custom_call.1} parent=1 // loop_header
      %s25 = sphi 0, %s29
      %p26 = scmp.ge.s32.totalorder %s25, 4
      %s35 = sphi 0, %s37
      %s38 = sphi 0, %s35
      %s39 = sphi 0, %s38
      %s55 = sphi 0, %s39
      %s59 = sphi 0, %s59
      %s61 = sphi 0, %s59
      %s62 = sphi 0, %s61
      %s76 = sphi 0, %s62
      %s80 = sphi 0, %s80
      %s82 = sphi 0, %s80
      %s83 = sphi 0, %s82
      %s97 = sphi 0, %s83
      %s101 = sphi 0, %s101
      %s103 = sphi 0, %s101
      %s104 = sphi 0, %s103
      %s118 = sphi 0, %s104
      %s122 = sphi 0, %s122
      %s124 = sphi 0, %s122
      %s125 = sphi 0, %s124
      %s139 = sphi 0, %s125
      %s143 = sphi 0, %s143
      %s145 = sphi 0, %s143
      %s146 = sphi 0, %s145
      %s160 = sphi 0, %s146
      %s164 = sphi 0, %s164
      %s166 = sphi 0, %s164
      %s167 = sphi 0, %s166
      %s181 = sphi 0, %s167
      %s185 = sphi 0, %s185
      %s187 = sphi 0, %s185
      %s188 = sphi 0, %s187
      %s202 = sphi 0, %s188
      %s206 = sphi 0, %s206
      %s208 = sphi 0, %s206
      %s209 = sphi 0, %s208
      %s223 = sphi 0, %s209
      %s227 = sphi 0, %s227
      %s229 = sphi 0, %s227
      %s230 = sphi 0, %s229
      %s244 = sphi 0, %s230
      %s248 = sphi 0, %s248
      %s250 = sphi 0, %s248
      %s251 = sphi 0, %s250
      %s265 = sphi 0, %s251
      %s269 = sphi 0, %s269
      %s271 = sphi 0, %s269
      %s272 = sphi 0, %s271
      %s286 = sphi 0, %s272
      %s290 = sphi 0, %s290
      %s292 = sphi 0, %s290
      %s293 = sphi 0, %s292
      %s307 = sphi 0, %s293
      %s313 = sphi 0, %s315
      %s316 = sphi 0, %s313
      %s317 = sphi 0, %s316
      %s333 = sphi 0, %s317
    $region4: #{tpu_custom_call.1} parent=1 // loop_header_branch
      %28 = sbr.rel (%p26) target = $region8
    $region5: #{tpu_custom_call.1} parent=1 // loop_body
      %s30 = ssub.s32 %s25, 1
      %s31 = ssub.s32 %s25, 2
      %s32 = sadd.s32 %s25, 1
      %s33 = ssub.s32 %s25, %s32
      %p34 = scmp.eq.s32.totalorder %s33, 0
      %s36 = sadd.s32 %s35, 1
      %s37 = scalar_select %p34, %s35, %s36
      %p40 = pneg %p34
      %p41 = scmp.eq.s32.totalorder %s25, 1
      %p42 = por %p40, %p41
      %p43 = scmp.ne.s32.totalorder %s35, %s38
      %p44 = scmp.eq.s32.totalorder %s25, 0
      %p45 = por %p43, %p44
      %p46 = scmp.ne.s32.totalorder %s35, %s38
      %p47 = scmp.eq.s32.totalorder %s30, 1
      %p48 = por %p46, %p47
      %p49 = scmp.ne.s32.totalorder %s38, %s39
      %p50 = scmp.eq.s32.totalorder %s30, 0
      %p51 = por %p49, %p50
      %p52 = scmp.ne.s32.totalorder %s38, %s39
      %p53 = scmp.eq.s32.totalorder %s31, 1
      %p54 = por %p52, %p53
      %p56 = scmp.ne.s32.totalorder %s39, %s55
      %p57 = scmp.eq.s32.totalorder %s31, 0
      %p58 = por %p56, %p57
      %s60 = sadd.s32 %s59, 1
      %p63 = scmp.eq.s32.totalorder %s25, 1
      %p64 = scmp.ne.s32.totalorder %s59, %s61
      %p65 = scmp.eq.s32.totalorder %s25, 0
      %p66 = por %p64, %p65
      %p67 = scmp.ne.s32.totalorder %s59, %s61
      %p68 = scmp.eq.s32.totalorder %s30, 1
      %p69 = por %p67, %p68
      %p70 = scmp.ne.s32.totalorder %s61, %s62
      %p71 = scmp.eq.s32.totalorder %s30, 0
      %p72 = por %p70, %p71
      %p73 = scmp.ne.s32.totalorder %s61, %s62
      %p74 = scmp.eq.s32.totalorder %s31, 1
      %p75 = por %p73, %p74
      %p77 = scmp.ne.s32.totalorder %s62, %s76
      %p78 = scmp.eq.s32.totalorder %s31, 0
      %p79 = por %p77, %p78
      %s81 = sadd.s32 %s80, 1
      %p84 = scmp.eq.s32.totalorder %s25, 1
      %p85 = scmp.ne.s32.totalorder %s80, %s82
      %p86 = scmp.eq.s32.totalorder %s25, 0
      %p87 = por %p85, %p86
      %p88 = scmp.ne.s32.totalorder %s80, %s82
      %p89 = scmp.eq.s32.totalorder %s30, 1
      %p90 = por %p88, %p89
      %p91 = scmp.ne.s32.totalorder %s82, %s83
      %p92 = scmp.eq.s32.totalorder %s30, 0
      %p93 = por %p91, %p92
      %p94 = scmp.ne.s32.totalorder %s82, %s83
      %p95 = scmp.eq.s32.totalorder %s31, 1
      %p96 = por %p94, %p95
      %p98 = scmp.ne.s32.totalorder %s83, %s97
      %p99 = scmp.eq.s32.totalorder %s31, 0
      %p100 = por %p98, %p99
      %s102 = sadd.s32 %s101, 1
      %p105 = scmp.eq.s32.totalorder %s25, 1
      %p106 = scmp.ne.s32.totalorder %s101, %s103
      %p107 = scmp.eq.s32.totalorder %s25, 0
      %p108 = por %p106, %p107
      %p109 = scmp.ne.s32.totalorder %s101, %s103
      %p110 = scmp.eq.s32.totalorder %s30, 1
      %p111 = por %p109, %p110
      %p112 = scmp.ne.s32.totalorder %s103, %s104
      %p113 = scmp.eq.s32.totalorder %s30, 0
      %p114 = por %p112, %p113
      %p115 = scmp.ne.s32.totalorder %s103, %s104
      %p116 = scmp.eq.s32.totalorder %s31, 1
      %p117 = por %p115, %p116
      %p119 = scmp.ne.s32.totalorder %s104, %s118
      %p120 = scmp.eq.s32.totalorder %s31, 0
      %p121 = por %p119, %p120
      %s123 = sadd.s32 %s122, 1
      %p126 = scmp.eq.s32.totalorder %s25, 1
      %p127 = scmp.ne.s32.totalorder %s122, %s124
      %p128 = scmp.eq.s32.totalorder %s25, 0
      %p129 = por %p127, %p128
      %p130 = scmp.ne.s32.totalorder %s122, %s124
      %p131 = scmp.eq.s32.totalorder %s30, 1
      %p132 = por %p130, %p131
      %p133 = scmp.ne.s32.totalorder %s124, %s125
      %p134 = scmp.eq.s32.totalorder %s30, 0
      %p135 = por %p133, %p134
      %p136 = scmp.ne.s32.totalorder %s124, %s125
      %p137 = scmp.eq.s32.totalorder %s31, 1
      %p138 = por %p136, %p137
      %p140 = scmp.ne.s32.totalorder %s125, %s139
      %p141 = scmp.eq.s32.totalorder %s31, 0
      %p142 = por %p140, %p141
      %s144 = sadd.s32 %s143, 1
      %p147 = scmp.eq.s32.totalorder %s25, 1
      %p148 = scmp.ne.s32.totalorder %s143, %s145
      %p149 = scmp.eq.s32.totalorder %s25, 0
      %p150 = por %p148, %p149
      %p151 = scmp.ne.s32.totalorder %s143, %s145
      %p152 = scmp.eq.s32.totalorder %s30, 1
      %p153 = por %p151, %p152
      %p154 = scmp.ne.s32.totalorder %s145, %s146
      %p155 = scmp.eq.s32.totalorder %s30, 0
      %p156 = por %p154, %p155
      %p157 = scmp.ne.s32.totalorder %s145, %s146
      %p158 = scmp.eq.s32.totalorder %s31, 1
      %p159 = por %p157, %p158
      %p161 = scmp.ne.s32.totalorder %s146, %s160
      %p162 = scmp.eq.s32.totalorder %s31, 0
      %p163 = por %p161, %p162
      %s165 = sadd.s32 %s164, 1
      %p168 = scmp.eq.s32.totalorder %s25, 1
      %p169 = scmp.ne.s32.totalorder %s164, %s166
      %p170 = scmp.eq.s32.totalorder %s25, 0
      %p171 = por %p169, %p170
      %p172 = scmp.ne.s32.totalorder %s164, %s166
      %p173 = scmp.eq.s32.totalorder %s30, 1
      %p174 = por %p172, %p173
      %p175 = scmp.ne.s32.totalorder %s166, %s167
      %p176 = scmp.eq.s32.totalorder %s30, 0
      %p177 = por %p175, %p176
      %p178 = scmp.ne.s32.totalorder %s166, %s167
      %p179 = scmp.eq.s32.totalorder %s31, 1
      %p180 = por %p178, %p179
      %p182 = scmp.ne.s32.totalorder %s167, %s181
      %p183 = scmp.eq.s32.totalorder %s31, 0
      %p184 = por %p182, %p183
      %s186 = sadd.s32 %s185, 1
      %p189 = scmp.eq.s32.totalorder %s25, 1
      %p190 = scmp.ne.s32.totalorder %s185, %s187
      %p191 = scmp.eq.s32.totalorder %s25, 0
      %p192 = por %p190, %p191
      %p193 = scmp.ne.s32.totalorder %s185, %s187
      %p194 = scmp.eq.s32.totalorder %s30, 1
      %p195 = por %p193, %p194
      %p196 = scmp.ne.s32.totalorder %s187, %s188
      %p197 = scmp.eq.s32.totalorder %s30, 0
      %p198 = por %p196, %p197
      %p199 = scmp.ne.s32.totalorder %s187, %s188
      %p200 = scmp.eq.s32.totalorder %s31, 1
      %p201 = por %p199, %p200
      %p203 = scmp.ne.s32.totalorder %s188, %s202
      %p204 = scmp.eq.s32.totalorder %s31, 0
      %p205 = por %p203, %p204
      %s207 = sadd.s32 %s206, 1
      %p210 = scmp.eq.s32.totalorder %s25, 1
      %p211 = scmp.ne.s32.totalorder %s206, %s208
      %p212 = scmp.eq.s32.totalorder %s25, 0
      %p213 = por %p211, %p212
      %p214 = scmp.ne.s32.totalorder %s206, %s208
      %p215 = scmp.eq.s32.totalorder %s30, 1
      %p216 = por %p214, %p215
      %p217 = scmp.ne.s32.totalorder %s208, %s209
      %p218 = scmp.eq.s32.totalorder %s30, 0
      %p219 = por %p217, %p218
      %p220 = scmp.ne.s32.totalorder %s208, %s209
      %p221 = scmp.eq.s32.totalorder %s31, 1
      %p222 = por %p220, %p221
      %p224 = scmp.ne.s32.totalorder %s209, %s223
      %p225 = scmp.eq.s32.totalorder %s31, 0
      %p226 = por %p224, %p225
      %s228 = sadd.s32 %s227, 1
      %p231 = scmp.eq.s32.totalorder %s25, 1
      %p232 = scmp.ne.s32.totalorder %s227, %s229
      %p233 = scmp.eq.s32.totalorder %s25, 0
      %p234 = por %p232, %p233
      %p235 = scmp.ne.s32.totalorder %s227, %s229
      %p236 = scmp.eq.s32.totalorder %s30, 1
      %p237 = por %p235, %p236
      %p238 = scmp.ne.s32.totalorder %s229, %s230
      %p239 = scmp.eq.s32.totalorder %s30, 0
      %p240 = por %p238, %p239
      %p241 = scmp.ne.s32.totalorder %s229, %s230
      %p242 = scmp.eq.s32.totalorder %s31, 1
      %p243 = por %p241, %p242
      %p245 = scmp.ne.s32.totalorder %s230, %s244
      %p246 = scmp.eq.s32.totalorder %s31, 0
      %p247 = por %p245, %p246
      %s249 = sadd.s32 %s248, 1
      %p252 = scmp.eq.s32.totalorder %s25, 1
      %p253 = scmp.ne.s32.totalorder %s248, %s250
      %p254 = scmp.eq.s32.totalorder %s25, 0
      %p255 = por %p253, %p254
      %p256 = scmp.ne.s32.totalorder %s248, %s250
      %p257 = scmp.eq.s32.totalorder %s30, 1
      %p258 = por %p256, %p257
      %p259 = scmp.ne.s32.totalorder %s250, %s251
      %p260 = scmp.eq.s32.totalorder %s30, 0
      %p261 = por %p259, %p260
      %p262 = scmp.ne.s32.totalorder %s250, %s251
      %p263 = scmp.eq.s32.totalorder %s31, 1
      %p264 = por %p262, %p263
      %p266 = scmp.ne.s32.totalorder %s251, %s265
      %p267 = scmp.eq.s32.totalorder %s31, 0
      %p268 = por %p266, %p267
      %s270 = sadd.s32 %s269, 1
      %p273 = scmp.eq.s32.totalorder %s25, 1
      %p274 = scmp.ne.s32.totalorder %s269, %s271
      %p275 = scmp.eq.s32.totalorder %s25, 0
      %p276 = por %p274, %p275
      %p277 = scmp.ne.s32.totalorder %s269, %s271
      %p278 = scmp.eq.s32.totalorder %s30, 1
      %p279 = por %p277, %p278
      %p280 = scmp.ne.s32.totalorder %s271, %s272
      %p281 = scmp.eq.s32.totalorder %s30, 0
      %p282 = por %p280, %p281
      %p283 = scmp.ne.s32.totalorder %s271, %s272
      %p284 = scmp.eq.s32.totalorder %s31, 1
      %p285 = por %p283, %p284
      %p287 = scmp.ne.s32.totalorder %s272, %s286
      %p288 = scmp.eq.s32.totalorder %s31, 0
      %p289 = por %p287, %p288
      %s291 = sadd.s32 %s290, 1
      %p294 = scmp.eq.s32.totalorder %s25, 1
      %p295 = scmp.ne.s32.totalorder %s290, %s292
      %p296 = scmp.eq.s32.totalorder %s25, 0
      %p297 = por %p295, %p296
      %p298 = scmp.ne.s32.totalorder %s290, %s292
      %p299 = scmp.eq.s32.totalorder %s30, 1
      %p300 = por %p298, %p299
      %p301 = scmp.ne.s32.totalorder %s292, %s293
      %p302 = scmp.eq.s32.totalorder %s30, 0
      %p303 = por %p301, %p302
      %p304 = scmp.ne.s32.totalorder %s292, %s293
      %p305 = scmp.eq.s32.totalorder %s31, 1
      %p306 = por %p304, %p305
      %p308 = scmp.ne.s32.totalorder %s293, %s307
      %p309 = scmp.eq.s32.totalorder %s31, 0
      %p310 = por %p308, %p309
      %s311 = ssub.s32 %s25, %s32
      %p312 = scmp.eq.s32.totalorder %s311, 0
      %s314 = sadd.s32 %s313, 1
      %s315 = scalar_select %p312, %s313, %s314
      %p318 = pneg %p312
      %p319 = scmp.eq.s32.totalorder %s25, 1
      %p320 = por %p318, %p319
      %p321 = scmp.ne.s32.totalorder %s313, %s316
      %p322 = scmp.eq.s32.totalorder %s25, 0
      %p323 = por %p321, %p322
      %p324 = scmp.ne.s32.totalorder %s313, %s316
      %p325 = scmp.eq.s32.totalorder %s30, 1
      %p326 = por %p324, %p325
      %p327 = scmp.ne.s32.totalorder %s316, %s317
      %p328 = scmp.eq.s32.totalorder %s30, 0
      %p329 = por %p327, %p328
      %p330 = scmp.ne.s32.totalorder %s316, %s317
      %p331 = scmp.eq.s32.totalorder %s31, 1
      %p332 = por %p330, %p331
      %p334 = scmp.ne.s32.totalorder %s317, %s333
      %p335 = scmp.eq.s32.totalorder %s31, 0
      %p336 = por %p334, %p335
      %p337 = scmp.le.s32.totalorder 1, %s25
      %p338 = scmp.lt.s32.totalorder %s25, 3
      %p339 = pnand %p337, %p338
      %p340 = pneg %p339
      // Predicated region
      $region9: #{tpu_custom_call.1} parent=5 // pred_check
        _
      $region10: #{tpu_custom_call.1} parent=5 // pred_check_branch
        %342 = sbr.rel (%p339) target = $region12
      $region11: #{tpu_custom_call.1} parent=5 // pred_region
        %s343 = ssub.s32 %s25, 1
        // Predicated region
        $region13: #{tpu_custom_call.1} parent=11 // pred_check
          %p344 = pneg %p72
        $region14: #{tpu_custom_call.1} parent=11 // pred_check_branch
          %346 = sbr.rel (%p344) target = $region16
        $region15: #{tpu_custom_call.1} parent=11 // pred_region
          _
        $region16: #{tpu_custom_call.1} parent=11 // pred_fallthru
          _
        // Predicated region
        $region17: #{tpu_custom_call.1} parent=11 // pred_check
          %p347 = pneg %p93
        $region18: #{tpu_custom_call.1} parent=11 // pred_check_branch
          %349 = sbr.rel (%p347) target = $region20
        $region19: #{tpu_custom_call.1} parent=11 // pred_region
          _
        $region20: #{tpu_custom_call.1} parent=11 // pred_fallthru
          _
        // Predicated region
        $region21: #{tpu_custom_call.1} parent=11 // pred_check
          %p350 = pneg %p114
        $region22: #{tpu_custom_call.1} parent=11 // pred_check_branch
          %352 = sbr.rel (%p350) target = $region24
        $region23: #{tpu_custom_call.1} parent=11 // pred_region
          _
        $region24: #{tpu_custom_call.1} parent=11 // pred_fallthru
          _
        // Predicated region
        $region25: #{tpu_custom_call.1} parent=11 // pred_check
          %p353 = pneg %p135
        $region26: #{tpu_custom_call.1} parent=11 // pred_check_branch
          %355 = sbr.rel (%p353) target = $region28
        $region27: #{tpu_custom_call.1} parent=11 // pred_region
          _
        $region28: #{tpu_custom_call.1} parent=11 // pred_fallthru
          _
        // Predicated region
        $region29: #{tpu_custom_call.1} parent=11 // pred_check
          %p356 = pneg %p156
        $region30: #{tpu_custom_call.1} parent=11 // pred_check_branch
          %358 = sbr.rel (%p356) target = $region32
        $region31: #{tpu_custom_call.1} parent=11 // pred_region
          %360 = vsyncadd [#allocation6], 0
          %s361 = sshll.u32 %s5, 4
          %s362 = int_to_ptr.hbm [resolvable:$true] %s361
          %s363 = sshll.u32 [#allocation5], 4
          %s364 = int_to_ptr.vmem [resolvable:$true] %s363
          %369 = dma.hbm_to_vmem [thread:$0]  %s362, 384, %s364, [#allocation6], 128, 128, 8
        $region32: #{tpu_custom_call.1} parent=11 // pred_fallthru
          _
        // Predicated region
        $region33: #{tpu_custom_call.1} parent=11 // pred_check
          %p370 = pneg %p177
        $region34: #{tpu_custom_call.1} parent=11 // pred_check_branch
          %372 = sbr.rel (%p370) target = $region36
        $region35: #{tpu_custom_call.1} parent=11 // pred_region
          _
        $region36: #{tpu_custom_call.1} parent=11 // pred_fallthru
          _
        // Predicated region
        $region37: #{tpu_custom_call.1} parent=11 // pred_check
          %p373 = pneg %p198
        $region38: #{tpu_custom_call.1} parent=11 // pred_check_branch
          %375 = sbr.rel (%p373) target = $region40
        $region39: #{tpu_custom_call.1} parent=11 // pred_region
          _
        $region40: #{tpu_custom_call.1} parent=11 // pred_fallthru
          _
        // Predicated region
        $region41: #{tpu_custom_call.1} parent=11 // pred_check
          %p376 = pneg %p219
        $region42: #{tpu_custom_call.1} parent=11 // pred_check_branch
          %378 = sbr.rel (%p376) target = $region44
        $region43: #{tpu_custom_call.1} parent=11 // pred_region
          _
        $region44: #{tpu_custom_call.1} parent=11 // pred_fallthru
          _
        // Predicated region
        $region45: #{tpu_custom_call.1} parent=11 // pred_check
          %p379 = pneg %p240
        $region46: #{tpu_custom_call.1} parent=11 // pred_check_branch
          %381 = sbr.rel (%p379) target = $region48
        $region47: #{tpu_custom_call.1} parent=11 // pred_region
          _
        $region48: #{tpu_custom_call.1} parent=11 // pred_fallthru
          _
        // Predicated region
        $region49: #{tpu_custom_call.1} parent=11 // pred_check
          %p382 = pneg %p261
        $region50: #{tpu_custom_call.1} parent=11 // pred_check_branch
          %384 = sbr.rel (%p382) target = $region52
        $region51: #{tpu_custom_call.1} parent=11 // pred_region
          _
        $region52: #{tpu_custom_call.1} parent=11 // pred_fallthru
          _
        // Predicated region
        $region53: #{tpu_custom_call.1} parent=11 // pred_check
          %p385 = pneg %p282
        $region54: #{tpu_custom_call.1} parent=11 // pred_check_branch
          %387 = sbr.rel (%p385) target = $region56
        $region55: #{tpu_custom_call.1} parent=11 // pred_region
          _
        $region56: #{tpu_custom_call.1} parent=11 // pred_fallthru
          _
        // Predicated region
        $region57: #{tpu_custom_call.1} parent=11 // pred_check
          %p388 = pneg %p303
        $region58: #{tpu_custom_call.1} parent=11 // pred_check_branch
          %390 = sbr.rel (%p388) target = $region60
        $region59: #{tpu_custom_call.1} parent=11 // pred_region
          _
        $region60: #{tpu_custom_call.1} parent=11 // pred_fallthru
          _
      $region12: #{tpu_custom_call.1} parent=5 // pred_fallthru
        _
      %p391 = scmp.lt.s32.totalorder %s25, 2
      // Predicated region
      $region61: #{tpu_custom_call.1} parent=5 // pred_check
        %p392 = pneg %p391
      $region62: #{tpu_custom_call.1} parent=5 // pred_check_branch
        %394 = sbr.rel (%p392) target = $region64
      $region63: #{tpu_custom_call.1} parent=5 // pred_region
        // Predicated region
        $region65: #{tpu_custom_call.1} parent=63 // pred_check
          %p395 = pneg %p45
        $region66: #{tpu_custom_call.1} parent=63 // pred_check_branch
          %397 = sbr.rel (%p395) target = $region68
        $region67: #{tpu_custom_call.1} parent=63 // pred_region
          %s398 = smul.u32 4, %s25
          %p399 = scmp.lt.s32.totalorder %s398, 7
          %s400 = scalar_select %p399, %s398, 7
          %s401 = smul.addr %s400, 2
          %s402 = smul.addr %s401, 2
          %s403 = scalar_lea.vmem %s0, %s402
          %s404 = smul.u32 4, %s25
        $region68: #{tpu_custom_call.1} parent=63 // pred_fallthru
          _
      $region64: #{tpu_custom_call.1} parent=5 // pred_fallthru
        _
      %p405 = scmp.le.s32.totalorder 1, %s25
      %p406 = scmp.lt.s32.totalorder %s25, 3
      %p407 = pnand %p405, %p406
      %p408 = pneg %p407
      // Predicated region
      $region69: #{tpu_custom_call.1} parent=5 // pred_check
        _
      $region70: #{tpu_custom_call.1} parent=5 // pred_check_branch
        %410 = sbr.rel (%p407) target = $region72
      $region71: #{tpu_custom_call.1} parent=5 // pred_region
        %s411 = ssub.s32 %s25, 1
        // Predicated region
        $region73: #{tpu_custom_call.1} parent=71 // pred_check
          %p412 = pneg %p156
        $region74: #{tpu_custom_call.1} parent=71 // pred_check_branch
          %414 = sbr.rel (%p412) target = $region76
        $region75: #{tpu_custom_call.1} parent=71 // pred_region
          %416 = dma.done [#allocation6], 384
        $region76: #{tpu_custom_call.1} parent=71 // pred_fallthru
          _
        %s417 = smul.u32 4, %s30
        %p418 = scmp.lt.s32.totalorder %s417, 7
        %s419 = scalar_select %p418, %s417, 7
        %s420 = smul.addr %s419, 2
        %s421 = smul.addr %s420, 2
        %s422 = scalar_lea.vmem %s0, %s421
        %p423 = pneg %p51
        %p424 = pneg %p48
        %p425 = pneg %p72
        %p426 = pneg %p69
        %p427 = pneg %p93
        %p428 = pneg %p90
        %p429 = pneg %p114
        %p430 = pneg %p111
        %p431 = pneg %p135
        %p432 = pneg %p132
        %p433 = pneg %p156
        %p434 = pneg %p153
        %p435 = pneg %p177
        %p436 = pneg %p174
        %p437 = pneg %p198
        %p438 = pneg %p195
        %p439 = pneg %p219
        %p440 = pneg %p216
        %p441 = pneg %p240
        %p442 = pneg %p237
        %p443 = pneg %p261
        %p444 = pneg %p258
        %p445 = pneg %p282
        %p446 = pneg %p279
        %p447 = pneg %p303
        %p448 = pneg %p300
        %p449 = pneg %p329
        %p450 = pneg %p326
        %s451 = sand.u32 %s316, 1
        %s452 = scalar_lea.sflag [#allocation7], %s451
        %s453 = sand.u32 %s316, 1
        %s454 = scalar_lea.vmem [#allocation8], %s453
        %s455 = smul.u32 4, %s30
        %p456 = scmp.lt.s32.totalorder %s455, 7
        %s457 = scalar_select %p456, %s455, 7
        %s458 = smul.addr %s457, 2
        %s459 = smul.addr %s458, 2
        %s460 = scalar_lea.vmem %s0, %s459
        %s461 = smul.u32 4, %s30
        %462 = vst [vmem:[#allocation2] sm:$0xff] 0.0
        %463 = vst [vmem:[#allocation2 + $0x8] sm:$0xff] 0.0
        %464 = vst [vmem:[#allocation2 + $0x10] sm:$0xff] 0.0
        %465 = vst [vmem:[#allocation2 + $0x18] sm:$0xff] 0.0
        %466 = vst [vmem:[#allocation2 + $0x20] sm:$0xff] 0.0
        %467 = vst [vmem:[#allocation2 + $0x28] sm:$0xff] 0.0
        %468 = vst [vmem:[#allocation2 + $0x30] sm:$0xff] 0.0
        %469 = vst [vmem:[#allocation2 + $0x38] sm:$0xff] 0.0
        %470 = vst [vmem:[#allocation2 + $0x40] sm:$0xff] 0.0
        %471 = vst [vmem:[#allocation2 + $0x48] sm:$0xff] 0.0
        %472 = vst [vmem:[#allocation2 + $0x50] sm:$0xff] 0.0
        %473 = vst [vmem:[#allocation2 + $0x58] sm:$0xff] 0.0
        %474 = vst [vmem:[#allocation2 + $0x60] sm:$0xff] 0.0
        %475 = vst [vmem:[#allocation2 + $0x68] sm:$0xff] 0.0
        %476 = vst [vmem:[#allocation2 + $0x70] sm:$0xff] 0.0
        %477 = vst [vmem:[#allocation2 + $0x78] sm:$0xff] 0.0
        %478 = vst [vmem:[#allocation2 + $0x80] sm:$0xff] 0.0
        %479 = vst [vmem:[#allocation2 + $0x88] sm:$0xff] 0.0
        %480 = vst [vmem:[#allocation2 + $0x90] sm:$0xff] 0.0
        %481 = vst [vmem:[#allocation2 + $0x98] sm:$0xff] 0.0
        %vm482 = vcmask 31744
        %483 = vst.msk [vmem:[#allocation3] sm:$0xff] %vm482, 0.0
        %v484 = vlaneseq
        %v485 = vand.u32 %v484, 127
        %v486 = vadd.s32 %v485, 128
        %vm487 = vcmp.lt.s32.totalorder %v485, 0
        %v488 = vsub.s32 0, %v485
        %v489 = vsel %vm487, %v488, %v485
        %v490 = vshrl.u32 %v489, 4
        %v491 = vand.u32 %v489, 15
        %v492 = vsub.s32 0, %v491
        %v493 = vsel %vm487, %v492, %v491
        %vm494 = vcmp.lt.s32.totalorder %v486, 0
        %v495 = vsub.s32 0, %v486
        %v496 = vsel %vm494, %v495, %v486
        %v497 = vshrl.u32 %v496, 4
        %v498 = vand.u32 %v496, 15
        %v499 = vsub.s32 0, %v498
        %v500 = vsel %vm494, %v499, %v498
        %vm501 = vcmp.ne.s32.totalorder %v493, 0
        %vm502 = vcmp.ne.s32.totalorder %v500, 0
        %vm503 = vcmp.lt.s32.totalorder %v493, 0
        %vm504 = vcmp.lt.s32.totalorder %v500, 0
        %vm505 = vmand %vm503, %vm501
        %vm506 = vmand %vm504, %vm502
        %v507 = vadd.s32 %v493, 16
        %v508 = vadd.s32 %v500, 16
        %v509 = vsel %vm505, %v507, %v493
        %v510 = vsel %vm506, %v508, %v500
        %v511 = vlaneseq
        %v512 = vshrl.u32 %v511, 7
        loop: start=0, step=1, limit=4
        $region77: #{tpu_custom_call.1} parent=71 // loop_pre_header
          _
        $region78: #{tpu_custom_call.1} parent=71 // loop_header
          %s514 = sphi 0, %s518
          %p515 = scmp.ge.s32.totalorder %s514, 4
        $region79: #{tpu_custom_call.1} parent=71 // loop_header_branch
          %517 = sbr.rel (%p515) target = $region83
        $region80: #{tpu_custom_call.1} parent=71 // loop_body
          %s519 = smul.u32 %s514, 2
          %s520 = smul.addr %s519, 2
          %s521 = scalar_lea.vmem %s460, %s520
          %v522 = vld [vmem:[%s521] sm:$0xf]
          %v524 = vperm.slane %v522, 1
          %v525 = vperm.slane %v522, 3
          %v528 = vperm.slane %v524, 1
          %v529 = vperm.slane %v525, 1
          %vm530 = vcmp.eq.s32.totalorder %v512, 1
          %531 = vrot.lane.b32.xlu0 %v528, 112
          %v532 = vpop.permute.xlu0 %531
          %533 = vrot.lane.b32.xlu0 %v529, 112
          %v534 = vpop.permute.xlu0 %533
          %vm535 = vcmp.lt.s32.totalorder %v485, 112
          %v536 = vsel %vm535, %v532, %v534
          %v537 = vsel %vm535, %v534, %v532
          %v538 = vsel %vm530, %v536, %v528
          %v539 = vsel %vm530, %v537, %v529
          %vm540 = vcmp.eq.s32.totalorder %v512, 2
          %541 = vrot.lane.b32.xlu0 %v528, 96
          %v542 = vpop.permute.xlu0 %541
          %543 = vrot.lane.b32.xlu0 %v529, 96
          %v544 = vpop.permute.xlu0 %543
          %vm545 = vcmp.lt.s32.totalorder %v485, 96
          %v546 = vsel %vm545, %v542, %v544
          %v547 = vsel %vm545, %v544, %v542
          %v548 = vsel %vm540, %v546, %v538
          %v549 = vsel %vm540, %v547, %v539
          %vm550 = vcmp.eq.s32.totalorder %v512, 3
          %551 = vrot.lane.b32.xlu0 %v528, 80
          %v552 = vpop.permute.xlu0 %551
          %553 = vrot.lane.b32.xlu0 %v529, 80
          %v554 = vpop.permute.xlu0 %553
          %vm555 = vcmp.lt.s32.totalorder %v485, 80
          %v556 = vsel %vm555, %v552, %v554
          %v557 = vsel %vm555, %v554, %v552
          %v558 = vsel %vm550, %v556, %v548
          %v559 = vsel %vm550, %v557, %v549
          %vm560 = vcmp.eq.s32.totalorder %v512, 4
          %561 = vrot.lane.b32.xlu0 %v528, 64
          %v562 = vpop.permute.xlu0 %561
          %563 = vrot.lane.b32.xlu0 %v529, 64
          %v564 = vpop.permute.xlu0 %563
          %vm565 = vcmp.lt.s32.totalorder %v485, 64
          %v566 = vsel %vm565, %v562, %v564
          %v567 = vsel %vm565, %v564, %v562
          %v568 = vsel %vm560, %v566, %v558
          %v569 = vsel %vm560, %v567, %v559
          %570 = vst [vmem:[#allocation2 + $0x50] sm:$0x1f] %v568
          %571 = vst [vmem:[#allocation2 + $0x58] sm:$0x1f] %v569
          %572 = vrot.lane.b32.xlu0 %v568, 127
          %v573 = vpop.permute.xlu0 %572
          %574 = vrot.lane.b32.xlu0 %v569, 127
          %v575 = vpop.permute.xlu0 %574
          %vm576 = vcmp.lt.s32.totalorder %v485, 127
          %v577 = vsel %vm576, %v573, %v575
          %v578 = vsel %vm576, %v575, %v573
          %579 = vrot.lane.b32.xlu0 %v568, 15
          %v580 = vpop.permute.xlu0 %579
          %581 = vrot.lane.b32.xlu0 %v569, 15
          %v582 = vpop.permute.xlu0 %581
          %vm583 = vcmp.lt.s32.totalorder %v485, 15
          %v584 = vsel %vm583, %v580, %v582
          %v585 = vsel %vm583, %v582, %v580
          %vm586 = vcmp.lt.s32.totalorder %v509, 15
          %vm587 = vcmp.lt.s32.totalorder %v510, 15
          %v588 = vsel %vm586, %v577, %v585
          %v589 = vsel %vm587, %v578, %v584
          %590 = vst [vmem:[#allocation2 + $0x60] sm:$0x1f] %v588
          %591 = vst [vmem:[#allocation2 + $0x68] sm:$0x1f] %v589
          %592 = vrot.lane.b32.xlu0 %v568, 126
          %v593 = vpop.permute.xlu0 %592
          %594 = vrot.lane.b32.xlu0 %v569, 126
          %v595 = vpop.permute.xlu0 %594
          %vm596 = vcmp.lt.s32.totalorder %v485, 126
          %v597 = vsel %vm596, %v593, %v595
          %v598 = vsel %vm596, %v595, %v593
          %599 = vrot.lane.b32.xlu0 %v568, 14
          %v600 = vpop.permute.xlu0 %599
          %601 = vrot.lane.b32.xlu0 %v569, 14
          %v602 = vpop.permute.xlu0 %601
          %vm603 = vcmp.lt.s32.totalorder %v485, 14
          %v604 = vsel %vm603, %v600, %v602
          %v605 = vsel %vm603, %v602, %v600
          %vm606 = vcmp.lt.s32.totalorder %v509, 14
          %vm607 = vcmp.lt.s32.totalorder %v510, 14
          %v608 = vsel %vm606, %v597, %v605
          %v609 = vsel %vm607, %v598, %v604
          %610 = vst [vmem:[#allocation2 + $0x70] sm:$0x1f] %v608
          %611 = vst [vmem:[#allocation2 + $0x78] sm:$0x1f] %v609
          %612 = vrot.lane.b32.xlu0 %v568, 125
          %v613 = vpop.permute.xlu0 %612
          %614 = vrot.lane.b32.xlu0 %v569, 125
          %v615 = vpop.permute.xlu0 %614
          %vm616 = vcmp.lt.s32.totalorder %v485, 125
          %v617 = vsel %vm616, %v613, %v615
          %v618 = vsel %vm616, %v615, %v613
          %619 = vrot.lane.b32.xlu0 %v568, 13
          %v620 = vpop.permute.xlu0 %619
          %621 = vrot.lane.b32.xlu0 %v569, 13
          %v622 = vpop.permute.xlu0 %621
          %vm623 = vcmp.lt.s32.totalorder %v485, 13
          %v624 = vsel %vm623, %v620, %v622
          %v625 = vsel %vm623, %v622, %v620
          %vm626 = vcmp.lt.s32.totalorder %v509, 13
          %vm627 = vcmp.lt.s32.totalorder %v510, 13
          %v628 = vsel %vm626, %v617, %v625
          %v629 = vsel %vm627, %v618, %v624
          %630 = vst [vmem:[#allocation2 + $0x80] sm:$0x1f] %v628
          %631 = vst [vmem:[#allocation2 + $0x88] sm:$0x1f] %v629
          %632 = vrot.lane.b32.xlu0 %v568, 124
          %v633 = vpop.permute.xlu0 %632
          %634 = vrot.lane.b32.xlu0 %v569, 124
          %v635 = vpop.permute.xlu0 %634
          %vm636 = vcmp.lt.s32.totalorder %v485, 124
          %v637 = vsel %vm636, %v633, %v635
          %v638 = vsel %vm636, %v635, %v633
          %639 = vrot.lane.b32.xlu0 %v568, 12
          %v640 = vpop.permute.xlu0 %639
          %641 = vrot.lane.b32.xlu0 %v569, 12
          %v642 = vpop.permute.xlu0 %641
          %vm643 = vcmp.lt.s32.totalorder %v485, 12
          %v644 = vsel %vm643, %v640, %v642
          %v645 = vsel %vm643, %v642, %v640
          %vm646 = vcmp.lt.s32.totalorder %v509, 12
          %vm647 = vcmp.lt.s32.totalorder %v510, 12
          %v648 = vsel %vm646, %v637, %v645
          %v649 = vsel %vm647, %v638, %v644
          %650 = vst [vmem:[#allocation2 + $0x90] sm:$0x1f] %v648
          %651 = vst [vmem:[#allocation2 + $0x98] sm:$0x1f] %v649
          %v652 = vperm.slane %v522, 0
          %v653 = vperm.slane %v522, 2
          %v656 = vperm.slane %v652, 0
          %v657 = vperm.slane %v653, 0
          %658 = vrot.lane.b32.xlu0 %v656, 112
          %v659 = vpop.permute.xlu0 %658
          %660 = vrot.lane.b32.xlu0 %v657, 112
          %v661 = vpop.permute.xlu0 %660
          %v662 = vsel %vm535, %v659, %v661
          %v663 = vsel %vm535, %v661, %v659
          %v664 = vsel %vm530, %v662, %v656
          %v665 = vsel %vm530, %v663, %v657
          %666 = vrot.lane.b32.xlu0 %v656, 96
          %v667 = vpop.permute.xlu0 %666
          %668 = vrot.lane.b32.xlu0 %v657, 96
          %v669 = vpop.permute.xlu0 %668
          %v670 = vsel %vm545, %v667, %v669
          %v671 = vsel %vm545, %v669, %v667
          %v672 = vsel %vm540, %v670, %v664
          %v673 = vsel %vm540, %v671, %v665
          %674 = vrot.lane.b32.xlu0 %v656, 80
          %v675 = vpop.permute.xlu0 %674
          %676 = vrot.lane.b32.xlu0 %v657, 80
          %v677 = vpop.permute.xlu0 %676
          %v678 = vsel %vm555, %v675, %v677
          %v679 = vsel %vm555, %v677, %v675
          %v680 = vsel %vm550, %v678, %v672
          %v681 = vsel %vm550, %v679, %v673
          %682 = vrot.lane.b32.xlu0 %v656, 64
          %v683 = vpop.permute.xlu0 %682
          %684 = vrot.lane.b32.xlu0 %v657, 64
          %v685 = vpop.permute.xlu0 %684
          %v686 = vsel %vm565, %v683, %v685
          %v687 = vsel %vm565, %v685, %v683
          %v688 = vsel %vm560, %v686, %v680
          %v689 = vsel %vm560, %v687, %v681
          %690 = vst [vmem:[#allocation2] sm:$0x1f] %v688
          %691 = vst [vmem:[#allocation2 + $0x8] sm:$0x1f] %v689
          %692 = vrot.lane.b32.xlu0 %v688, 127
          %v693 = vpop.permute.xlu0 %692
          %694 = vrot.lane.b32.xlu0 %v689, 127
          %v695 = vpop.permute.xlu0 %694
          %v696 = vsel %vm576, %v693, %v695
          %v697 = vsel %vm576, %v695, %v693
          %698 = vrot.lane.b32.xlu0 %v688, 15
          %v699 = vpop.permute.xlu0 %698
          %700 = vrot.lane.b32.xlu0 %v689, 15
          %v701 = vpop.permute.xlu0 %700
          %v702 = vsel %vm583, %v699, %v701
          %v703 = vsel %vm583, %v701, %v699
          %v704 = vsel %vm586, %v696, %v703
          %v705 = vsel %vm587, %v697, %v702
          %706 = vst [vmem:[#allocation2 + $0x10] sm:$0x1f] %v704
          %707 = vst [vmem:[#allocation2 + $0x18] sm:$0x1f] %v705
          %708 = vrot.lane.b32.xlu0 %v688, 126
          %v709 = vpop.permute.xlu0 %708
          %710 = vrot.lane.b32.xlu0 %v689, 126
          %v711 = vpop.permute.xlu0 %710
          %v712 = vsel %vm596, %v709, %v711
          %v713 = vsel %vm596, %v711, %v709
          %714 = vrot.lane.b32.xlu0 %v688, 14
          %v715 = vpop.permute.xlu0 %714
          %716 = vrot.lane.b32.xlu0 %v689, 14
          %v717 = vpop.permute.xlu0 %716
          %v718 = vsel %vm603, %v715, %v717
          %v719 = vsel %vm603, %v717, %v715
          %v720 = vsel %vm606, %v712, %v719
          %v721 = vsel %vm607, %v713, %v718
          %722 = vst [vmem:[#allocation2 + $0x20] sm:$0x1f] %v720
          %723 = vst [vmem:[#allocation2 + $0x28] sm:$0x1f] %v721
          %724 = vrot.lane.b32.xlu0 %v688, 125
          %v725 = vpop.permute.xlu0 %724
          %726 = vrot.lane.b32.xlu0 %v689, 125
          %v727 = vpop.permute.xlu0 %726
          %v728 = vsel %vm616, %v725, %v727
          %v729 = vsel %vm616, %v727, %v725
          %730 = vrot.lane.b32.xlu0 %v688, 13
          %v731 = vpop.permute.xlu0 %730
          %732 = vrot.lane.b32.xlu0 %v689, 13
          %v733 = vpop.permute.xlu0 %732
          %v734 = vsel %vm623, %v731, %v733
          %v735 = vsel %vm623, %v733, %v731
          %v736 = vsel %vm626, %v728, %v735
          %v737 = vsel %vm627, %v729, %v734
          %738 = vst [vmem:[#allocation2 + $0x30] sm:$0x1f] %v736
          %739 = vst [vmem:[#allocation2 + $0x38] sm:$0x1f] %v737
          %740 = vrot.lane.b32.xlu0 %v688, 124
          %v741 = vpop.permute.xlu0 %740
          %742 = vrot.lane.b32.xlu0 %v689, 124
          %v743 = vpop.permute.xlu0 %742
          %v744 = vsel %vm636, %v741, %v743
          %v745 = vsel %vm636, %v743, %v741
          %746 = vrot.lane.b32.xlu0 %v688, 12
          %v747 = vpop.permute.xlu0 %746
          %748 = vrot.lane.b32.xlu0 %v689, 12
          %v749 = vpop.permute.xlu0 %748
          %v750 = vsel %vm643, %v747, %v749
          %v751 = vsel %vm643, %v749, %v747
          %v752 = vsel %vm646, %v744, %v751
          %v753 = vsel %vm647, %v745, %v750
          %754 = vst [vmem:[#allocation2 + $0x40] sm:$0x1f] %v752
          %755 = vst [vmem:[#allocation2 + $0x48] sm:$0x1f] %v753
          %v756 = vld [vmem:[%s1] sm:$0xff]
          %v757 = vld [vmem:[#allocation2] sm:$0xff]
          %v758 = vld [vmem:[#allocation2 + $0x8] sm:$0xff]
          %v759 = vld [vmem:[#allocation2 + $0x10] sm:$0xff]
          %v760 = vld [vmem:[#allocation2 + $0x18] sm:$0xff]
          %v761 = vld [vmem:[#allocation2 + $0x20] sm:$0xff]
          %v762 = vld [vmem:[#allocation2 + $0x28] sm:$0xff]
          %v763 = vld [vmem:[#allocation2 + $0x30] sm:$0xff]
          %v764 = vld [vmem:[#allocation2 + $0x38] sm:$0xff]
          %v765 = vld [vmem:[#allocation2 + $0x40] sm:$0xff]
          %v766 = vld [vmem:[#allocation2 + $0x48] sm:$0xff]
          %v767 = vld [vmem:[#allocation2 + $0x50] sm:$0xff]
          %v768 = vld [vmem:[#allocation2 + $0x58] sm:$0xff]
          %v769 = vld [vmem:[#allocation2 + $0x60] sm:$0xff]
          %v770 = vld [vmem:[#allocation2 + $0x68] sm:$0xff]
          %v771 = vld [vmem:[#allocation2 + $0x70] sm:$0xff]
          %v772 = vld [vmem:[#allocation2 + $0x78] sm:$0xff]
          %v773 = vld [vmem:[#allocation2 + $0x80] sm:$0xff]
          %v774 = vld [vmem:[#allocation2 + $0x88] sm:$0xff]
          %v775 = vld [vmem:[#allocation2 + $0x90] sm:$0xff]
          %v776 = vld [vmem:[#allocation2 + $0x98] sm:$0xff]
          %v777 = vld [vmem:[%s2] sm:$0xff]
          %779 = vset.pattern.permute.xlu0 0
          %780 = vperm.xlu0 %779, %v777
          %v781 = vpop.permute.xlu0 %780
          %vm783 = vcmask 654336
          %v785 = vsel %vm783, %v756, 0
          %787 = vmatpush.msra.mxu0 0.0
          %788 = vmatpush.msra.mxu0 0.0
          %789 = vmatpush.msra.mxu0 0.0
          %790 = vmatpush.msra.mxu0 0.0
          %791 = vmatpush.msra.mxu0 0.0
          %792 = vmatpush.msra.mxu0 0.0
          %793 = vmatpush.msra.mxu0 %v775
          %794 = vmatpush.msra.mxu0 %v773
          %795 = vmatpush.msra.mxu0 %v771
          %796 = vmatpush.msra.mxu0 %v769
          %797 = vmatpush.msra.mxu0 %v767
          %798 = vmatpush.msra.mxu0 %v765
          %799 = vmatpush.msra.mxu0 %v763
          %800 = vmatpush.msra.mxu0 %v761
          %801 = vmatpush.msra.mxu0 %v759
          %802 = vmatpush.msra.mxu0 %v757
          %803 = vmatmul.f32.gmra.mxu0 %v785
          %v804 = vpop.f32.mrf.mxu0
          %v805 = vadd.f32 %v781, %v804
          %806 = vdwg.mxu0
          %807 = vmatpush.msra.mxu0 0.0
          %808 = vmatpush.msra.mxu0 0.0
          %809 = vmatpush.msra.mxu0 0.0
          %810 = vmatpush.msra.mxu0 0.0
          %811 = vmatpush.msra.mxu0 0.0
          %812 = vmatpush.msra.mxu0 0.0
          %813 = vmatpush.msra.mxu0 %v776
          %814 = vmatpush.msra.mxu0 %v774
          %815 = vmatpush.msra.mxu0 %v772
          %816 = vmatpush.msra.mxu0 %v770
          %817 = vmatpush.msra.mxu0 %v768
          %818 = vmatpush.msra.mxu0 %v766
          %819 = vmatpush.msra.mxu0 %v764
          %820 = vmatpush.msra.mxu0 %v762
          %821 = vmatpush.msra.mxu0 %v760
          %822 = vmatpush.msra.mxu0 %v758
          %823 = vmatmul.f32.gmra.mxu0 %v785
          %v824 = vpop.f32.mrf.mxu0
          %v825 = vadd.f32 %v781, %v824
          %826 = vdwg.mxu0
          %v827 = vmax.f32 %v805, 0.0
          %v828 = vmax.f32 %v825, 0.0
          %v829 = vld [vmem:[%s3] sm:$0xff]
          %v830 = vld [vmem:[%s4] sm:$0xff]
          %832 = vset.pattern.permute.xlu0 0
          %833 = vperm.xlu0 %832, %v830
          %v834 = vpop.permute.xlu0 %833
          %vm836 = vcmask 64512
          %v838 = vsel %vm836, %v829, 0
          %840 = vmatpush.msra.mxu0 0.0
          %841 = vmatpush.msra.mxu0 0.0
          %842 = vmatpush.msra.mxu0 0.0
          %843 = vmatpush.msra.mxu0 0.0
          %844 = vmatpush.msra.mxu0 0.0
          %845 = vmatpush.msra.mxu0 0.0
          %846 = vmatpush.msra.mxu0 0.0
          %847 = vmatpush.msra.mxu0 0.0
          %848 = vmatpush.msra.mxu0 0.0
          %849 = vmatpush.msra.mxu0 0.0
          %850 = vmatpush.msra.mxu0 0.0
          %851 = vmatpush.msra.mxu0 0.0
          %852 = vmatpush.msra.mxu0 0.0
          %853 = vmatpush.msra.mxu0 0.0
          %854 = vmatpush.msra.mxu0 0.0
          %855 = vmatpush.msra.mxu0 %v827
          %856 = vmatmul.f32.gmra.mxu0 %v838
          %v857 = vpop.f32.mrf.mxu0
          %v858 = vadd.f32 %v834, %v857
          %859 = vdwg.mxu0
          %860 = vmatpush.msra.mxu0 0.0
          %861 = vmatpush.msra.mxu0 0.0
          %862 = vmatpush.msra.mxu0 0.0
          %863 = vmatpush.msra.mxu0 0.0
          %864 = vmatpush.msra.mxu0 0.0
          %865 = vmatpush.msra.mxu0 0.0
          %866 = vmatpush.msra.mxu0 0.0
          %867 = vmatpush.msra.mxu0 0.0
          %868 = vmatpush.msra.mxu0 0.0
          %869 = vmatpush.msra.mxu0 0.0
          %870 = vmatpush.msra.mxu0 0.0
          %871 = vmatpush.msra.mxu0 0.0
          %872 = vmatpush.msra.mxu0 0.0
          %873 = vmatpush.msra.mxu0 0.0
          %874 = vmatpush.msra.mxu0 0.0
          %875 = vmatpush.msra.mxu0 %v828
          %876 = vmatmul.f32.gmra.mxu0 %v838
          %v877 = vpop.f32.mrf.mxu0
          %v878 = vadd.f32 %v834, %v877
          %879 = vdwg.mxu0
          %v880 = vmax.f32 %v858, 0.0
          %v881 = vmax.f32 %v878, 0.0
          %v882 = vld [vmem:[#allocation5] sm:$0xff]
          %v883 = vld [vmem:[%s6] sm:$0xff]
          %885 = vset.pattern.permute.xlu0 0
          %886 = vperm.xlu0 %885, %v883
          %v887 = vpop.permute.xlu0 %886
          %v890 = vsel %vm836, %v882, 0
          %892 = vmatpush.msra.mxu0 0.0
          %893 = vmatpush.msra.mxu0 0.0
          %894 = vmatpush.msra.mxu0 0.0
          %895 = vmatpush.msra.mxu0 0.0
          %896 = vmatpush.msra.mxu0 0.0
          %897 = vmatpush.msra.mxu0 0.0
          %898 = vmatpush.msra.mxu0 0.0
          %899 = vmatpush.msra.mxu0 0.0
          %900 = vmatpush.msra.mxu0 0.0
          %901 = vmatpush.msra.mxu0 0.0
          %902 = vmatpush.msra.mxu0 0.0
          %903 = vmatpush.msra.mxu0 0.0
          %904 = vmatpush.msra.mxu0 0.0
          %905 = vmatpush.msra.mxu0 0.0
          %906 = vmatpush.msra.mxu0 0.0
          %907 = vmatpush.msra.mxu0 %v880
          %908 = vmatmul.f32.gmra.mxu0 %v890
          %v909 = vpop.f32.mrf.mxu0
          %v910 = vadd.f32 %v887, %v909
          %911 = vdwg.mxu0
          %912 = vmatpush.msra.mxu0 0.0
          %913 = vmatpush.msra.mxu0 0.0
          %914 = vmatpush.msra.mxu0 0.0
          %915 = vmatpush.msra.mxu0 0.0
          %916 = vmatpush.msra.mxu0 0.0
          %917 = vmatpush.msra.mxu0 0.0
          %918 = vmatpush.msra.mxu0 0.0
          %919 = vmatpush.msra.mxu0 0.0
          %920 = vmatpush.msra.mxu0 0.0
          %921 = vmatpush.msra.mxu0 0.0
          %922 = vmatpush.msra.mxu0 0.0
          %923 = vmatpush.msra.mxu0 0.0
          %924 = vmatpush.msra.mxu0 0.0
          %925 = vmatpush.msra.mxu0 0.0
          %926 = vmatpush.msra.mxu0 0.0
          %927 = vmatpush.msra.mxu0 %v881
          %928 = vmatmul.f32.gmra.mxu0 %v890
          %v929 = vpop.f32.mrf.mxu0
          %v930 = vadd.f32 %v887, %v929
          %931 = vdwg.mxu0
          %v932 = vmax.f32 %v910, 0.0
          %v933 = vmax.f32 %v930, 0.0
          %v934 = vld [vmem:[%s7] sm:$0x1]
          %v935 = vld [vmem:[%s8] sm:$0x1]
          %937 = vset.pattern.permute.xlu0 0
          %938 = vperm.xlu0 %937, %v935
          %v939 = vpop.permute.xlu0 %938
          %v941 = vperm.slane %v939, 0
          %v943 = vsel %vm836, %v934, 0
          %945 = vmatpush.msra.mxu0 0.0
          %946 = vmatpush.msra.mxu0 0.0
          %947 = vmatpush.msra.mxu0 0.0
          %948 = vmatpush.msra.mxu0 0.0
          %949 = vmatpush.msra.mxu0 0.0
          %950 = vmatpush.msra.mxu0 0.0
          %951 = vmatpush.msra.mxu0 0.0
          %952 = vmatpush.msra.mxu0 0.0
          %953 = vmatpush.msra.mxu0 0.0
          %954 = vmatpush.msra.mxu0 0.0
          %955 = vmatpush.msra.mxu0 0.0
          %956 = vmatpush.msra.mxu0 0.0
          %957 = vmatpush.msra.mxu0 0.0
          %958 = vmatpush.msra.mxu0 0.0
          %959 = vmatpush.msra.mxu0 0.0
          %960 = vmatpush.msra.mxu0 %v932
          %961 = vmatmul.f32.gmra.mxu0 %v943
          %v962 = vpop.f32.mrf.mxu0
          %v963 = vadd.f32 %v941, %v962
          %964 = vdwg.mxu0
          %965 = vmatpush.msra.mxu0 0.0
          %966 = vmatpush.msra.mxu0 0.0
          %967 = vmatpush.msra.mxu0 0.0
          %968 = vmatpush.msra.mxu0 0.0
          %969 = vmatpush.msra.mxu0 0.0
          %970 = vmatpush.msra.mxu0 0.0
          %971 = vmatpush.msra.mxu0 0.0
          %972 = vmatpush.msra.mxu0 0.0
          %973 = vmatpush.msra.mxu0 0.0
          %974 = vmatpush.msra.mxu0 0.0
          %975 = vmatpush.msra.mxu0 0.0
          %976 = vmatpush.msra.mxu0 0.0
          %977 = vmatpush.msra.mxu0 0.0
          %978 = vmatpush.msra.mxu0 0.0
          %979 = vmatpush.msra.mxu0 0.0
          %980 = vmatpush.msra.mxu0 %v933
          %981 = vmatmul.f32.gmra.mxu0 %v943
          %v982 = vpop.f32.mrf.mxu0
          %v983 = vadd.f32 %v941, %v982
          %984 = vdwg.mxu0
          %v985 = vperm.slane %v963, 0
          %v986 = vperm.slane %v983, 0
          %987 = vrot.lane.b32.xlu0 %v985, 112
          %v988 = vpop.permute.xlu0 %987
          %989 = vrot.lane.b32.xlu0 %v986, 112
          %v990 = vpop.permute.xlu0 %989
          %v991 = vsel %vm535, %v988, %v990
          %v992 = vsel %vm535, %v990, %v988
          %v993 = vsel %vm530, %v991, %v985
          %v994 = vsel %vm530, %v992, %v986
          %995 = vrot.lane.b32.xlu0 %v985, 96
          %v996 = vpop.permute.xlu0 %995
          %997 = vrot.lane.b32.xlu0 %v986, 96
          %v998 = vpop.permute.xlu0 %997
          %v999 = vsel %vm545, %v996, %v998
          %v1000 = vsel %vm545, %v998, %v996
          %v1001 = vsel %vm540, %v999, %v993
          %v1002 = vsel %vm540, %v1000, %v994
          %1003 = vrot.lane.b32.xlu0 %v985, 80
          %v1004 = vpop.permute.xlu0 %1003
          %1005 = vrot.lane.b32.xlu0 %v986, 80
          %v1006 = vpop.permute.xlu0 %1005
          %v1007 = vsel %vm555, %v1004, %v1006
          %v1008 = vsel %vm555, %v1006, %v1004
          %v1009 = vsel %vm550, %v1007, %v1001
          %v1010 = vsel %vm550, %v1008, %v1002
          %1011 = vrot.lane.b32.xlu0 %v985, 64
          %v1012 = vpop.permute.xlu0 %1011
          %1013 = vrot.lane.b32.xlu0 %v986, 64
          %v1014 = vpop.permute.xlu0 %1013
          %v1015 = vsel %vm565, %v1012, %v1014
          %v1016 = vsel %vm565, %v1014, %v1012
          %v1017 = vsel %vm560, %v1015, %v1009
          %v1018 = vsel %vm560, %v1016, %v1010
          %1019 = vst [vmem:[#allocation2] sm:$0x1f] %v1017
          %1020 = vst [vmem:[#allocation2 + $0x8] sm:$0x1f] %v1018
          %1021 = vrot.lane.b32.xlu0 %v1017, 127
          %v1022 = vpop.permute.xlu0 %1021
          %1023 = vrot.lane.b32.xlu0 %v1018, 127
          %v1024 = vpop.permute.xlu0 %1023
          %v1025 = vsel %vm576, %v1022, %v1024
          %v1026 = vsel %vm576, %v1024, %v1022
          %1027 = vrot.lane.b32.xlu0 %v1017, 15
          %v1028 = vpop.permute.xlu0 %1027
          %1029 = vrot.lane.b32.xlu0 %v1018, 15
          %v1030 = vpop.permute.xlu0 %1029
          %v1031 = vsel %vm583, %v1028, %v1030
          %v1032 = vsel %vm583, %v1030, %v1028
          %v1033 = vsel %vm586, %v1025, %v1032
          %v1034 = vsel %vm587, %v1026, %v1031
          %1035 = vst [vmem:[#allocation2 + $0x10] sm:$0x1f] %v1033
          %1036 = vst [vmem:[#allocation2 + $0x18] sm:$0x1f] %v1034
          %1037 = vrot.lane.b32.xlu0 %v1017, 126
          %v1038 = vpop.permute.xlu0 %1037
          %1039 = vrot.lane.b32.xlu0 %v1018, 126
          %v1040 = vpop.permute.xlu0 %1039
          %v1041 = vsel %vm596, %v1038, %v1040
          %v1042 = vsel %vm596, %v1040, %v1038
          %1043 = vrot.lane.b32.xlu0 %v1017, 14
          %v1044 = vpop.permute.xlu0 %1043
          %1045 = vrot.lane.b32.xlu0 %v1018, 14
          %v1046 = vpop.permute.xlu0 %1045
          %v1047 = vsel %vm603, %v1044, %v1046
          %v1048 = vsel %vm603, %v1046, %v1044
          %v1049 = vsel %vm606, %v1041, %v1048
          %v1050 = vsel %vm607, %v1042, %v1047
          %1051 = vst [vmem:[#allocation2 + $0x20] sm:$0x1f] %v1049
          %1052 = vst [vmem:[#allocation2 + $0x28] sm:$0x1f] %v1050
          %1053 = vrot.lane.b32.xlu0 %v1017, 125
          %v1054 = vpop.permute.xlu0 %1053
          %1055 = vrot.lane.b32.xlu0 %v1018, 125
          %v1056 = vpop.permute.xlu0 %1055
          %v1057 = vsel %vm616, %v1054, %v1056
          %v1058 = vsel %vm616, %v1056, %v1054
          %1059 = vrot.lane.b32.xlu0 %v1017, 13
          %v1060 = vpop.permute.xlu0 %1059
          %1061 = vrot.lane.b32.xlu0 %v1018, 13
          %v1062 = vpop.permute.xlu0 %1061
          %v1063 = vsel %vm623, %v1060, %v1062
          %v1064 = vsel %vm623, %v1062, %v1060
          %v1065 = vsel %vm626, %v1057, %v1064
          %v1066 = vsel %vm627, %v1058, %v1063
          %1067 = vst [vmem:[#allocation2 + $0x30] sm:$0x1f] %v1065
          %1068 = vst [vmem:[#allocation2 + $0x38] sm:$0x1f] %v1066
          %1069 = vrot.lane.b32.xlu0 %v1017, 124
          %v1070 = vpop.permute.xlu0 %1069
          %1071 = vrot.lane.b32.xlu0 %v1018, 124
          %v1072 = vpop.permute.xlu0 %1071
          %v1073 = vsel %vm636, %v1070, %v1072
          %v1074 = vsel %vm636, %v1072, %v1070
          %1075 = vrot.lane.b32.xlu0 %v1017, 12
          %v1076 = vpop.permute.xlu0 %1075
          %1077 = vrot.lane.b32.xlu0 %v1018, 12
          %v1078 = vpop.permute.xlu0 %1077
          %v1079 = vsel %vm643, %v1076, %v1078
          %v1080 = vsel %vm643, %v1078, %v1076
          %v1081 = vsel %vm646, %v1073, %v1080
          %v1082 = vsel %vm647, %v1074, %v1079
          %1083 = vst [vmem:[#allocation2 + $0x40] sm:$0x1f] %v1081
          %1084 = vst [vmem:[#allocation2 + $0x48] sm:$0x1f] %v1082
          %s1085 = scalar_lea.vmem %s1, 8
          %v1086 = vld [vmem:[%s1085] sm:$0xff]
          %v1087 = vld [vmem:[#allocation2] sm:$0xff]
          %v1088 = vld [vmem:[#allocation2 + $0x8] sm:$0xff]
          %v1089 = vld [vmem:[#allocation2 + $0x10] sm:$0xff]
          %v1090 = vld [vmem:[#allocation2 + $0x18] sm:$0xff]
          %v1091 = vld [vmem:[#allocation2 + $0x20] sm:$0xff]
          %v1092 = vld [vmem:[#allocation2 + $0x28] sm:$0xff]
          %v1093 = vld [vmem:[#allocation2 + $0x30] sm:$0xff]
          %v1094 = vld [vmem:[#allocation2 + $0x38] sm:$0xff]
          %v1095 = vld [vmem:[#allocation2 + $0x40] sm:$0xff]
          %v1096 = vld [vmem:[#allocation2 + $0x48] sm:$0xff]
          %v1097 = vld [vmem:[#allocation2 + $0x50] sm:$0xff]
          %v1098 = vld [vmem:[#allocation2 + $0x58] sm:$0xff]
          %v1099 = vld [vmem:[#allocation2 + $0x60] sm:$0xff]
          %v1100 = vld [vmem:[#allocation2 + $0x68] sm:$0xff]
          %v1101 = vld [vmem:[#allocation2 + $0x70] sm:$0xff]
          %v1102 = vld [vmem:[#allocation2 + $0x78] sm:$0xff]
          %v1103 = vld [vmem:[#allocation2 + $0x80] sm:$0xff]
          %v1104 = vld [vmem:[#allocation2 + $0x88] sm:$0xff]
          %v1105 = vld [vmem:[#allocation2 + $0x90] sm:$0xff]
          %v1106 = vld [vmem:[#allocation2 + $0x98] sm:$0xff]
          %s1107 = scalar_lea.vmem %s2, 8
          %v1108 = vld [vmem:[%s1107] sm:$0xff]
          %1110 = vset.pattern.permute.xlu0 0
          %1111 = vperm.xlu0 %1110, %v1108
          %v1112 = vpop.permute.xlu0 %1111
          %v1115 = vsel %vm783, %v1086, 0
          %1117 = vmatpush.msra.mxu0 0.0
          %1118 = vmatpush.msra.mxu0 0.0
          %1119 = vmatpush.msra.mxu0 0.0
          %1120 = vmatpush.msra.mxu0 0.0
          %1121 = vmatpush.msra.mxu0 0.0
          %1122 = vmatpush.msra.mxu0 0.0
          %1123 = vmatpush.msra.mxu0 %v1105
          %1124 = vmatpush.msra.mxu0 %v1103
          %1125 = vmatpush.msra.mxu0 %v1101
          %1126 = vmatpush.msra.mxu0 %v1099
          %1127 = vmatpush.msra.mxu0 %v1097
          %1128 = vmatpush.msra.mxu0 %v1095
          %1129 = vmatpush.msra.mxu0 %v1093
          %1130 = vmatpush.msra.mxu0 %v1091
          %1131 = vmatpush.msra.mxu0 %v1089
          %1132 = vmatpush.msra.mxu0 %v1087
          %1133 = vmatmul.f32.gmra.mxu0 %v1115
          %v1134 = vpop.f32.mrf.mxu0
          %v1135 = vadd.f32 %v1112, %v1134
          %1136 = vdwg.mxu0
          %1137 = vmatpush.msra.mxu0 0.0
          %1138 = vmatpush.msra.mxu0 0.0
          %1139 = vmatpush.msra.mxu0 0.0
          %1140 = vmatpush.msra.mxu0 0.0
          %1141 = vmatpush.msra.mxu0 0.0
          %1142 = vmatpush.msra.mxu0 0.0
          %1143 = vmatpush.msra.mxu0 %v1106
          %1144 = vmatpush.msra.mxu0 %v1104
          %1145 = vmatpush.msra.mxu0 %v1102
          %1146 = vmatpush.msra.mxu0 %v1100
          %1147 = vmatpush.msra.mxu0 %v1098
          %1148 = vmatpush.msra.mxu0 %v1096
          %1149 = vmatpush.msra.mxu0 %v1094
          %1150 = vmatpush.msra.mxu0 %v1092
          %1151 = vmatpush.msra.mxu0 %v1090
          %1152 = vmatpush.msra.mxu0 %v1088
          %1153 = vmatmul.f32.gmra.mxu0 %v1115
          %v1154 = vpop.f32.mrf.mxu0
          %v1155 = vadd.f32 %v1112, %v1154
          %1156 = vdwg.mxu0
          %v1157 = vmax.f32 %v1135, 0.0
          %v1158 = vmax.f32 %v1155, 0.0
          %s1159 = scalar_lea.vmem %s3, 8
          %v1160 = vld [vmem:[%s1159] sm:$0xff]
          %s1161 = scalar_lea.vmem %s4, 8
          %v1162 = vld [vmem:[%s1161] sm:$0xff]
          %1164 = vset.pattern.permute.xlu0 0
          %1165 = vperm.xlu0 %1164, %v1162
          %v1166 = vpop.permute.xlu0 %1165
          %v1169 = vsel %vm836, %v1160, 0
          %1171 = vmatpush.msra.mxu0 0.0
          %1172 = vmatpush.msra.mxu0 0.0
          %1173 = vmatpush.msra.mxu0 0.0
          %1174 = vmatpush.msra.mxu0 0.0
          %1175 = vmatpush.msra.mxu0 0.0
          %1176 = vmatpush.msra.mxu0 0.0
          %1177 = vmatpush.msra.mxu0 0.0
          %1178 = vmatpush.msra.mxu0 0.0
          %1179 = vmatpush.msra.mxu0 0.0
          %1180 = vmatpush.msra.mxu0 0.0
          %1181 = vmatpush.msra.mxu0 0.0
          %1182 = vmatpush.msra.mxu0 0.0
          %1183 = vmatpush.msra.mxu0 0.0
          %1184 = vmatpush.msra.mxu0 0.0
          %1185 = vmatpush.msra.mxu0 0.0
          %1186 = vmatpush.msra.mxu0 %v1157
          %1187 = vmatmul.f32.gmra.mxu0 %v1169
          %v1188 = vpop.f32.mrf.mxu0
          %v1189 = vadd.f32 %v1166, %v1188
          %1190 = vdwg.mxu0
          %1191 = vmatpush.msra.mxu0 0.0
          %1192 = vmatpush.msra.mxu0 0.0
          %1193 = vmatpush.msra.mxu0 0.0
          %1194 = vmatpush.msra.mxu0 0.0
          %1195 = vmatpush.msra.mxu0 0.0
          %1196 = vmatpush.msra.mxu0 0.0
          %1197 = vmatpush.msra.mxu0 0.0
          %1198 = vmatpush.msra.mxu0 0.0
          %1199 = vmatpush.msra.mxu0 0.0
          %1200 = vmatpush.msra.mxu0 0.0
          %1201 = vmatpush.msra.mxu0 0.0
          %1202 = vmatpush.msra.mxu0 0.0
          %1203 = vmatpush.msra.mxu0 0.0
          %1204 = vmatpush.msra.mxu0 0.0
          %1205 = vmatpush.msra.mxu0 0.0
          %1206 = vmatpush.msra.mxu0 %v1158
          %1207 = vmatmul.f32.gmra.mxu0 %v1169
          %v1208 = vpop.f32.mrf.mxu0
          %v1209 = vadd.f32 %v1166, %v1208
          %1210 = vdwg.mxu0
          %v1211 = vmax.f32 %v1189, 0.0
          %v1212 = vmax.f32 %v1209, 0.0
          %s1213 = scalar_lea.vmem [#allocation5], 8
          %v1214 = vld [vmem:[%s1213] sm:$0xff]
          %s1215 = scalar_lea.vmem %s6, 8
          %v1216 = vld [vmem:[%s1215] sm:$0xff]
          %1218 = vset.pattern.permute.xlu0 0
          %1219 = vperm.xlu0 %1218, %v1216
          %v1220 = vpop.permute.xlu0 %1219
          %v1223 = vsel %vm836, %v1214, 0
          %1225 = vmatpush.msra.mxu0 0.0
          %1226 = vmatpush.msra.mxu0 0.0
          %1227 = vmatpush.msra.mxu0 0.0
          %1228 = vmatpush.msra.mxu0 0.0
          %1229 = vmatpush.msra.mxu0 0.0
          %1230 = vmatpush.msra.mxu0 0.0
          %1231 = vmatpush.msra.mxu0 0.0
          %1232 = vmatpush.msra.mxu0 0.0
          %1233 = vmatpush.msra.mxu0 0.0
          %1234 = vmatpush.msra.mxu0 0.0
          %1235 = vmatpush.msra.mxu0 0.0
          %1236 = vmatpush.msra.mxu0 0.0
          %1237 = vmatpush.msra.mxu0 0.0
          %1238 = vmatpush.msra.mxu0 0.0
          %1239 = vmatpush.msra.mxu0 0.0
          %1240 = vmatpush.msra.mxu0 %v1211
          %1241 = vmatmul.f32.gmra.mxu0 %v1223
          %v1242 = vpop.f32.mrf.mxu0
          %v1243 = vadd.f32 %v1220, %v1242
          %1244 = vdwg.mxu0
          %1245 = vmatpush.msra.mxu0 0.0
          %1246 = vmatpush.msra.mxu0 0.0
          %1247 = vmatpush.msra.mxu0 0.0
          %1248 = vmatpush.msra.mxu0 0.0
          %1249 = vmatpush.msra.mxu0 0.0
          %1250 = vmatpush.msra.mxu0 0.0
          %1251 = vmatpush.msra.mxu0 0.0
          %1252 = vmatpush.msra.mxu0 0.0
          %1253 = vmatpush.msra.mxu0 0.0
          %1254 = vmatpush.msra.mxu0 0.0
          %1255 = vmatpush.msra.mxu0 0.0
          %1256 = vmatpush.msra.mxu0 0.0
          %1257 = vmatpush.msra.mxu0 0.0
          %1258 = vmatpush.msra.mxu0 0.0
          %1259 = vmatpush.msra.mxu0 0.0
          %1260 = vmatpush.msra.mxu0 %v1212
          %1261 = vmatmul.f32.gmra.mxu0 %v1223
          %v1262 = vpop.f32.mrf.mxu0
          %v1263 = vadd.f32 %v1220, %v1262
          %1264 = vdwg.mxu0
          %v1265 = vmax.f32 %v1243, 0.0
          %v1266 = vmax.f32 %v1263, 0.0
          %s1267 = scalar_lea.vmem %s7, 1
          %v1268 = vld [vmem:[%s1267] sm:$0x1]
          %s1269 = scalar_lea.vmem %s8, 1
          %v1270 = vld [vmem:[%s1269] sm:$0x1]
          %1272 = vset.pattern.permute.xlu0 0
          %1273 = vperm.xlu0 %1272, %v1270
          %v1274 = vpop.permute.xlu0 %1273
          %v1276 = vperm.slane %v1274, 0
          %v1278 = vsel %vm836, %v1268, 0
          %1280 = vmatpush.msra.mxu0 0.0
          %1281 = vmatpush.msra.mxu0 0.0
          %1282 = vmatpush.msra.mxu0 0.0
          %1283 = vmatpush.msra.mxu0 0.0
          %1284 = vmatpush.msra.mxu0 0.0
          %1285 = vmatpush.msra.mxu0 0.0
          %1286 = vmatpush.msra.mxu0 0.0
          %1287 = vmatpush.msra.mxu0 0.0
          %1288 = vmatpush.msra.mxu0 0.0
          %1289 = vmatpush.msra.mxu0 0.0
          %1290 = vmatpush.msra.mxu0 0.0
          %1291 = vmatpush.msra.mxu0 0.0
          %1292 = vmatpush.msra.mxu0 0.0
          %1293 = vmatpush.msra.mxu0 0.0
          %1294 = vmatpush.msra.mxu0 0.0
          %1295 = vmatpush.msra.mxu0 %v1265
          %1296 = vmatmul.f32.gmra.mxu0 %v1278
          %v1297 = vpop.f32.mrf.mxu0
          %v1298 = vadd.f32 %v1276, %v1297
          %1299 = vdwg.mxu0
          %1300 = vmatpush.msra.mxu0 0.0
          %1301 = vmatpush.msra.mxu0 0.0
          %1302 = vmatpush.msra.mxu0 0.0
          %1303 = vmatpush.msra.mxu0 0.0
          %1304 = vmatpush.msra.mxu0 0.0
          %1305 = vmatpush.msra.mxu0 0.0
          %1306 = vmatpush.msra.mxu0 0.0
          %1307 = vmatpush.msra.mxu0 0.0
          %1308 = vmatpush.msra.mxu0 0.0
          %1309 = vmatpush.msra.mxu0 0.0
          %1310 = vmatpush.msra.mxu0 0.0
          %1311 = vmatpush.msra.mxu0 0.0
          %1312 = vmatpush.msra.mxu0 0.0
          %1313 = vmatpush.msra.mxu0 0.0
          %1314 = vmatpush.msra.mxu0 0.0
          %1315 = vmatpush.msra.mxu0 %v1266
          %1316 = vmatmul.f32.gmra.mxu0 %v1278
          %v1317 = vpop.f32.mrf.mxu0
          %v1318 = vadd.f32 %v1276, %v1317
          %1319 = vdwg.mxu0
          %v1320 = vperm.slane %v1298, 0
          %v1321 = vperm.slane %v1318, 0
          %1322 = vrot.lane.b32.xlu0 %v1320, 112
          %v1323 = vpop.permute.xlu0 %1322
          %1324 = vrot.lane.b32.xlu0 %v1321, 112
          %v1325 = vpop.permute.xlu0 %1324
          %v1326 = vsel %vm535, %v1323, %v1325
          %v1327 = vsel %vm535, %v1325, %v1323
          %v1328 = vsel %vm530, %v1326, %v1320
          %v1329 = vsel %vm530, %v1327, %v1321
          %1330 = vrot.lane.b32.xlu0 %v1320, 96
          %v1331 = vpop.permute.xlu0 %1330
          %1332 = vrot.lane.b32.xlu0 %v1321, 96
          %v1333 = vpop.permute.xlu0 %1332
          %v1334 = vsel %vm545, %v1331, %v1333
          %v1335 = vsel %vm545, %v1333, %v1331
          %v1336 = vsel %vm540, %v1334, %v1328
          %v1337 = vsel %vm540, %v1335, %v1329
          %1338 = vrot.lane.b32.xlu0 %v1320, 80
          %v1339 = vpop.permute.xlu0 %1338
          %1340 = vrot.lane.b32.xlu0 %v1321, 80
          %v1341 = vpop.permute.xlu0 %1340
          %v1342 = vsel %vm555, %v1339, %v1341
          %v1343 = vsel %vm555, %v1341, %v1339
          %v1344 = vsel %vm550, %v1342, %v1336
          %v1345 = vsel %vm550, %v1343, %v1337
          %1346 = vrot.lane.b32.xlu0 %v1320, 64
          %v1347 = vpop.permute.xlu0 %1346
          %1348 = vrot.lane.b32.xlu0 %v1321, 64
          %v1349 = vpop.permute.xlu0 %1348
          %v1350 = vsel %vm565, %v1347, %v1349
          %v1351 = vsel %vm565, %v1349, %v1347
          %v1352 = vsel %vm560, %v1350, %v1344
          %v1353 = vsel %vm560, %v1351, %v1345
          %1354 = vst [vmem:[#allocation2] sm:$0x1f] %v1352
          %1355 = vst [vmem:[#allocation2 + $0x8] sm:$0x1f] %v1353
          %1356 = vrot.lane.b32.xlu0 %v1352, 127
          %v1357 = vpop.permute.xlu0 %1356
          %1358 = vrot.lane.b32.xlu0 %v1353, 127
          %v1359 = vpop.permute.xlu0 %1358
          %v1360 = vsel %vm576, %v1357, %v1359
          %v1361 = vsel %vm576, %v1359, %v1357
          %1362 = vrot.lane.b32.xlu0 %v1352, 15
          %v1363 = vpop.permute.xlu0 %1362
          %1364 = vrot.lane.b32.xlu0 %v1353, 15
          %v1365 = vpop.permute.xlu0 %1364
          %v1366 = vsel %vm583, %v1363, %v1365
          %v1367 = vsel %vm583, %v1365, %v1363
          %v1368 = vsel %vm586, %v1360, %v1367
          %v1369 = vsel %vm587, %v1361, %v1366
          %1370 = vst [vmem:[#allocation2 + $0x10] sm:$0x1f] %v1368
          %1371 = vst [vmem:[#allocation2 + $0x18] sm:$0x1f] %v1369
          %1372 = vrot.lane.b32.xlu0 %v1352, 126
          %v1373 = vpop.permute.xlu0 %1372
          %1374 = vrot.lane.b32.xlu0 %v1353, 126
          %v1375 = vpop.permute.xlu0 %1374
          %v1376 = vsel %vm596, %v1373, %v1375
          %v1377 = vsel %vm596, %v1375, %v1373
          %1378 = vrot.lane.b32.xlu0 %v1352, 14
          %v1379 = vpop.permute.xlu0 %1378
          %1380 = vrot.lane.b32.xlu0 %v1353, 14
          %v1381 = vpop.permute.xlu0 %1380
          %v1382 = vsel %vm603, %v1379, %v1381
          %v1383 = vsel %vm603, %v1381, %v1379
          %v1384 = vsel %vm606, %v1376, %v1383
          %v1385 = vsel %vm607, %v1377, %v1382
          %1386 = vst [vmem:[#allocation2 + $0x20] sm:$0x1f] %v1384
          %1387 = vst [vmem:[#allocation2 + $0x28] sm:$0x1f] %v1385
          %1388 = vrot.lane.b32.xlu0 %v1352, 125
          %v1389 = vpop.permute.xlu0 %1388
          %1390 = vrot.lane.b32.xlu0 %v1353, 125
          %v1391 = vpop.permute.xlu0 %1390
          %v1392 = vsel %vm616, %v1389, %v1391
          %v1393 = vsel %vm616, %v1391, %v1389
          %1394 = vrot.lane.b32.xlu0 %v1352, 13
          %v1395 = vpop.permute.xlu0 %1394
          %1396 = vrot.lane.b32.xlu0 %v1353, 13
          %v1397 = vpop.permute.xlu0 %1396
          %v1398 = vsel %vm623, %v1395, %v1397
          %v1399 = vsel %vm623, %v1397, %v1395
          %v1400 = vsel %vm626, %v1392, %v1399
          %v1401 = vsel %vm627, %v1393, %v1398
          %1402 = vst [vmem:[#allocation2 + $0x30] sm:$0x1f] %v1400
          %1403 = vst [vmem:[#allocation2 + $0x38] sm:$0x1f] %v1401
          %1404 = vrot.lane.b32.xlu0 %v1352, 124
          %v1405 = vpop.permute.xlu0 %1404
          %1406 = vrot.lane.b32.xlu0 %v1353, 124
          %v1407 = vpop.permute.xlu0 %1406
          %v1408 = vsel %vm636, %v1405, %v1407
          %v1409 = vsel %vm636, %v1407, %v1405
          %1410 = vrot.lane.b32.xlu0 %v1352, 12
          %v1411 = vpop.permute.xlu0 %1410
          %1412 = vrot.lane.b32.xlu0 %v1353, 12
          %v1413 = vpop.permute.xlu0 %1412
          %v1414 = vsel %vm643, %v1411, %v1413
          %v1415 = vsel %vm643, %v1413, %v1411
          %v1416 = vsel %vm646, %v1408, %v1415
          %v1417 = vsel %vm647, %v1409, %v1414
          %1418 = vst [vmem:[#allocation2 + $0x40] sm:$0x1f] %v1416
          %1419 = vst [vmem:[#allocation2 + $0x48] sm:$0x1f] %v1417
          %s1420 = scalar_lea.vmem %s1, 16
          %v1421 = vld [vmem:[%s1420] sm:$0xff]
          %v1422 = vld [vmem:[#allocation2] sm:$0xff]
          %v1423 = vld [vmem:[#allocation2 + $0x8] sm:$0xff]
          %v1424 = vld [vmem:[#allocation2 + $0x10] sm:$0xff]
          %v1425 = vld [vmem:[#allocation2 + $0x18] sm:$0xff]
          %v1426 = vld [vmem:[#allocation2 + $0x20] sm:$0xff]
          %v1427 = vld [vmem:[#allocation2 + $0x28] sm:$0xff]
          %v1428 = vld [vmem:[#allocation2 + $0x30] sm:$0xff]
          %v1429 = vld [vmem:[#allocation2 + $0x38] sm:$0xff]
          %v1430 = vld [vmem:[#allocation2 + $0x40] sm:$0xff]
          %v1431 = vld [vmem:[#allocation2 + $0x48] sm:$0xff]
          %v1432 = vld [vmem:[#allocation2 + $0x50] sm:$0xff]
          %v1433 = vld [vmem:[#allocation2 + $0x58] sm:$0xff]
          %v1434 = vld [vmem:[#allocation2 + $0x60] sm:$0xff]
          %v1435 = vld [vmem:[#allocation2 + $0x68] sm:$0xff]
          %v1436 = vld [vmem:[#allocation2 + $0x70] sm:$0xff]
          %v1437 = vld [vmem:[#allocation2 + $0x78] sm:$0xff]
          %v1438 = vld [vmem:[#allocation2 + $0x80] sm:$0xff]
          %v1439 = vld [vmem:[#allocation2 + $0x88] sm:$0xff]
          %v1440 = vld [vmem:[#allocation2 + $0x90] sm:$0xff]
          %v1441 = vld [vmem:[#allocation2 + $0x98] sm:$0xff]
          %s1442 = scalar_lea.vmem %s2, 16
          %v1443 = vld [vmem:[%s1442] sm:$0xff]
          %1445 = vset.pattern.permute.xlu0 0
          %1446 = vperm.xlu0 %1445, %v1443
          %v1447 = vpop.permute.xlu0 %1446
          %v1450 = vsel %vm783, %v1421, 0
          %1452 = vmatpush.msra.mxu0 0.0
          %1453 = vmatpush.msra.mxu0 0.0
          %1454 = vmatpush.msra.mxu0 0.0
          %1455 = vmatpush.msra.mxu0 0.0
          %1456 = vmatpush.msra.mxu0 0.0
          %1457 = vmatpush.msra.mxu0 0.0
          %1458 = vmatpush.msra.mxu0 %v1440
          %1459 = vmatpush.msra.mxu0 %v1438
          %1460 = vmatpush.msra.mxu0 %v1436
          %1461 = vmatpush.msra.mxu0 %v1434
          %1462 = vmatpush.msra.mxu0 %v1432
          %1463 = vmatpush.msra.mxu0 %v1430
          %1464 = vmatpush.msra.mxu0 %v1428
          %1465 = vmatpush.msra.mxu0 %v1426
          %1466 = vmatpush.msra.mxu0 %v1424
          %1467 = vmatpush.msra.mxu0 %v1422
          %1468 = vmatmul.f32.gmra.mxu0 %v1450
          %v1469 = vpop.f32.mrf.mxu0
          %v1470 = vadd.f32 %v1447, %v1469
          %1471 = vdwg.mxu0
          %1472 = vmatpush.msra.mxu0 0.0
          %1473 = vmatpush.msra.mxu0 0.0
          %1474 = vmatpush.msra.mxu0 0.0
          %1475 = vmatpush.msra.mxu0 0.0
          %1476 = vmatpush.msra.mxu0 0.0
          %1477 = vmatpush.msra.mxu0 0.0
          %1478 = vmatpush.msra.mxu0 %v1441
          %1479 = vmatpush.msra.mxu0 %v1439
          %1480 = vmatpush.msra.mxu0 %v1437
          %1481 = vmatpush.msra.mxu0 %v1435
          %1482 = vmatpush.msra.mxu0 %v1433
          %1483 = vmatpush.msra.mxu0 %v1431
          %1484 = vmatpush.msra.mxu0 %v1429
          %1485 = vmatpush.msra.mxu0 %v1427
          %1486 = vmatpush.msra.mxu0 %v1425
          %1487 = vmatpush.msra.mxu0 %v1423
          %1488 = vmatmul.f32.gmra.mxu0 %v1450
          %v1489 = vpop.f32.mrf.mxu0
          %v1490 = vadd.f32 %v1447, %v1489
          %1491 = vdwg.mxu0
          %v1492 = vmax.f32 %v1470, 0.0
          %v1493 = vmax.f32 %v1490, 0.0
          %s1494 = scalar_lea.vmem %s3, 16
          %v1495 = vld [vmem:[%s1494] sm:$0xff]
          %s1496 = scalar_lea.vmem %s4, 16
          %v1497 = vld [vmem:[%s1496] sm:$0xff]
          %1499 = vset.pattern.permute.xlu0 0
          %1500 = vperm.xlu0 %1499, %v1497
          %v1501 = vpop.permute.xlu0 %1500
          %v1504 = vsel %vm836, %v1495, 0
          %1506 = vmatpush.msra.mxu0 0.0
          %1507 = vmatpush.msra.mxu0 0.0
          %1508 = vmatpush.msra.mxu0 0.0
          %1509 = vmatpush.msra.mxu0 0.0
          %1510 = vmatpush.msra.mxu0 0.0
          %1511 = vmatpush.msra.mxu0 0.0
          %1512 = vmatpush.msra.mxu0 0.0
          %1513 = vmatpush.msra.mxu0 0.0
          %1514 = vmatpush.msra.mxu0 0.0
          %1515 = vmatpush.msra.mxu0 0.0
          %1516 = vmatpush.msra.mxu0 0.0
          %1517 = vmatpush.msra.mxu0 0.0
          %1518 = vmatpush.msra.mxu0 0.0
          %1519 = vmatpush.msra.mxu0 0.0
          %1520 = vmatpush.msra.mxu0 0.0
          %1521 = vmatpush.msra.mxu0 %v1492
          %1522 = vmatmul.f32.gmra.mxu0 %v1504
          %v1523 = vpop.f32.mrf.mxu0
          %v1524 = vadd.f32 %v1501, %v1523
          %1525 = vdwg.mxu0
          %1526 = vmatpush.msra.mxu0 0.0
          %1527 = vmatpush.msra.mxu0 0.0
          %1528 = vmatpush.msra.mxu0 0.0
          %1529 = vmatpush.msra.mxu0 0.0
          %1530 = vmatpush.msra.mxu0 0.0
          %1531 = vmatpush.msra.mxu0 0.0
          %1532 = vmatpush.msra.mxu0 0.0
          %1533 = vmatpush.msra.mxu0 0.0
          %1534 = vmatpush.msra.mxu0 0.0
          %1535 = vmatpush.msra.mxu0 0.0
          %1536 = vmatpush.msra.mxu0 0.0
          %1537 = vmatpush.msra.mxu0 0.0
          %1538 = vmatpush.msra.mxu0 0.0
          %1539 = vmatpush.msra.mxu0 0.0
          %1540 = vmatpush.msra.mxu0 0.0
          %1541 = vmatpush.msra.mxu0 %v1493
          %1542 = vmatmul.f32.gmra.mxu0 %v1504
          %v1543 = vpop.f32.mrf.mxu0
          %v1544 = vadd.f32 %v1501, %v1543
          %1545 = vdwg.mxu0
          %v1546 = vmax.f32 %v1524, 0.0
          %v1547 = vmax.f32 %v1544, 0.0
          %s1548 = scalar_lea.vmem [#allocation5], 16
          %v1549 = vld [vmem:[%s1548] sm:$0xff]
          %s1550 = scalar_lea.vmem %s6, 16
          %v1551 = vld [vmem:[%s1550] sm:$0xff]
          %1553 = vset.pattern.permute.xlu0 0
          %1554 = vperm.xlu0 %1553, %v1551
          %v1555 = vpop.permute.xlu0 %1554
          %v1558 = vsel %vm836, %v1549, 0
          %1560 = vmatpush.msra.mxu0 0.0
          %1561 = vmatpush.msra.mxu0 0.0
          %1562 = vmatpush.msra.mxu0 0.0
          %1563 = vmatpush.msra.mxu0 0.0
          %1564 = vmatpush.msra.mxu0 0.0
          %1565 = vmatpush.msra.mxu0 0.0
          %1566 = vmatpush.msra.mxu0 0.0
          %1567 = vmatpush.msra.mxu0 0.0
          %1568 = vmatpush.msra.mxu0 0.0
          %1569 = vmatpush.msra.mxu0 0.0
          %1570 = vmatpush.msra.mxu0 0.0
          %1571 = vmatpush.msra.mxu0 0.0
          %1572 = vmatpush.msra.mxu0 0.0
          %1573 = vmatpush.msra.mxu0 0.0
          %1574 = vmatpush.msra.mxu0 0.0
          %1575 = vmatpush.msra.mxu0 %v1546
          %1576 = vmatmul.f32.gmra.mxu0 %v1558
          %v1577 = vpop.f32.mrf.mxu0
          %v1578 = vadd.f32 %v1555, %v1577
          %1579 = vdwg.mxu0
          %1580 = vmatpush.msra.mxu0 0.0
          %1581 = vmatpush.msra.mxu0 0.0
          %1582 = vmatpush.msra.mxu0 0.0
          %1583 = vmatpush.msra.mxu0 0.0
          %1584 = vmatpush.msra.mxu0 0.0
          %1585 = vmatpush.msra.mxu0 0.0
          %1586 = vmatpush.msra.mxu0 0.0
          %1587 = vmatpush.msra.mxu0 0.0
          %1588 = vmatpush.msra.mxu0 0.0
          %1589 = vmatpush.msra.mxu0 0.0
          %1590 = vmatpush.msra.mxu0 0.0
          %1591 = vmatpush.msra.mxu0 0.0
          %1592 = vmatpush.msra.mxu0 0.0
          %1593 = vmatpush.msra.mxu0 0.0
          %1594 = vmatpush.msra.mxu0 0.0
          %1595 = vmatpush.msra.mxu0 %v1547
          %1596 = vmatmul.f32.gmra.mxu0 %v1558
          %v1597 = vpop.f32.mrf.mxu0
          %v1598 = vadd.f32 %v1555, %v1597
          %1599 = vdwg.mxu0
          %v1600 = vmax.f32 %v1578, 0.0
          %v1601 = vmax.f32 %v1598, 0.0
          %v1602 = vadd.f32 %v1600, %v1601
          %1603 = vadd.xlane.f32.xlu0 %v1602
          %v1604 = vpop.xlane.xlu0 %1603
          %v1605 = vstv %s514
          %vm1606 = vcmp.eq.s32.totalorder %v485, %v1605
          %v1607 = vld [vmem:[#allocation3] sm:$0xff]
          %v1608 = vsel %vm1606, %v1604, %v1607
          %1609 = vst.msk [vmem:[#allocation3] sm:$0xff] %vm482, %v1608
        $region81: #{tpu_custom_call.1} parent=71 // loop_footer
          %s518 = sadd.s32 1, %s514
        $region82: #{tpu_custom_call.1} parent=71 // loop_footer_branch
          %513 = sbr.rel target = $region78
        $region83: #{tpu_custom_call.1} parent=71 // loop_exit
          _
        %v1610 = vld [vmem:[%s9] sm:$0xff]
        %v1611 = vld [vmem:[#allocation3] sm:$0xff]
        %v1612 = vld [vmem:[%s10] sm:$0xff]
        %1614 = vset.pattern.permute.xlu0 0
        %1615 = vperm.xlu0 %1614, %v1612
        %v1616 = vpop.permute.xlu0 %1615
        %vm1618 = vcmask 64512
        %v1620 = vsel %vm1618, %v1610, 0
        %1622 = vmatpush.msra.mxu0 0.0
        %1623 = vmatpush.msra.mxu0 0.0
        %1624 = vmatpush.msra.mxu0 0.0
        %1625 = vmatpush.msra.mxu0 0.0
        %1626 = vmatpush.msra.mxu0 0.0
        %1627 = vmatpush.msra.mxu0 0.0
        %1628 = vmatpush.msra.mxu0 0.0
        %1629 = vmatpush.msra.mxu0 0.0
        %1630 = vmatpush.msra.mxu0 0.0
        %1631 = vmatpush.msra.mxu0 0.0
        %1632 = vmatpush.msra.mxu0 0.0
        %1633 = vmatpush.msra.mxu0 0.0
        %1634 = vmatpush.msra.mxu0 0.0
        %1635 = vmatpush.msra.mxu0 0.0
        %1636 = vmatpush.msra.mxu0 0.0
        %1637 = vmatpush.msra.mxu0 %v1611
        %1638 = vmatmul.f32.gmra.mxu0 %v1620
        %v1639 = vpop.f32.mrf.mxu0
        %v1640 = vadd.f32 %v1616, %v1639
        %1641 = vdwg.mxu0
        %v1642 = vmax.f32 %v1640, 0.0
        %v1643 = vld [vmem:[%s11] sm:$0x1]
        %v1644 = vld [vmem:[#allocation4] sm:$0x1]
        %1646 = vset.pattern.permute.xlu0 0
        %1647 = vperm.xlu0 %1646, %v1644
        %v1648 = vpop.permute.xlu0 %1647
        %v1650 = vperm.slane %v1648, 0
        %v1652 = vsel %vm1618, %v1643, 0
        %1654 = vmatpush.msra.mxu0 0.0
        %1655 = vmatpush.msra.mxu0 0.0
        %1656 = vmatpush.msra.mxu0 0.0
        %1657 = vmatpush.msra.mxu0 0.0
        %1658 = vmatpush.msra.mxu0 0.0
        %1659 = vmatpush.msra.mxu0 0.0
        %1660 = vmatpush.msra.mxu0 0.0
        %1661 = vmatpush.msra.mxu0 0.0
        %1662 = vmatpush.msra.mxu0 0.0
        %1663 = vmatpush.msra.mxu0 0.0
        %1664 = vmatpush.msra.mxu0 0.0
        %1665 = vmatpush.msra.mxu0 0.0
        %1666 = vmatpush.msra.mxu0 0.0
        %1667 = vmatpush.msra.mxu0 0.0
        %1668 = vmatpush.msra.mxu0 0.0
        %1669 = vmatpush.msra.mxu0 %v1642
        %1670 = vmatmul.f32.gmra.mxu0 %v1652
        %v1671 = vpop.f32.mrf.mxu0
        %v1672 = vadd.f32 %v1650, %v1671
        %1673 = vdwg.mxu0
        %vm1674 = vcmask 24576
        %1675 = vst.msk [vmem:[%s454] sm:$0x1] %vm1674, %v1672
        %s1676 = sand.u32 %s316, 1
        %s1677 = scalar_lea.sflag [#allocation7], %s1676
        %s1678 = sand.u32 %s316, 1
        %s1679 = scalar_lea.vmem [#allocation8], %s1678
        // Predicated region
        $region84: #{tpu_custom_call.1} parent=71 // pred_check
          %p1680 = pneg %p326
        $region85: #{tpu_custom_call.1} parent=71 // pred_check_branch
          %1682 = sbr.rel (%p1680) target = $region87
        $region86: #{tpu_custom_call.1} parent=71 // pred_region
          %1684 = vsyncadd %s1677, 0
          %s1685 = scalar_lea.hbm %s13, %s30
          %s1687 = sshll.u32 %s1679, 4
          %s1688 = int_to_ptr.vmem [resolvable:$true] %s1687
          %s1689 = sshll.u32 %s1685, 4
          %s1690 = int_to_ptr.hbm [resolvable:$true] %s1689
          %1692 = dma.vmem_to_hbm [thread:$0]  %s1688, 16, %s1690, %s1677
        $region87: #{tpu_custom_call.1} parent=71 // pred_fallthru
          _
      $region72: #{tpu_custom_call.1} parent=5 // pred_fallthru
        _
      %p1693 = scmp.le.s32.totalorder 2, %s25
      // Predicated region
      $region88: #{tpu_custom_call.1} parent=5 // pred_check
        %p1694 = pneg %p1693
      $region89: #{tpu_custom_call.1} parent=5 // pred_check_branch
        %1696 = sbr.rel (%p1694) target = $region91
      $region90: #{tpu_custom_call.1} parent=5 // pred_region
        %s1697 = ssub.s32 %s25, 2
        // Predicated region
        $region92: #{tpu_custom_call.1} parent=90 // pred_check
          %p1698 = pneg %p332
        $region93: #{tpu_custom_call.1} parent=90 // pred_check_branch
          %1700 = sbr.rel (%p1698) target = $region95
        $region94: #{tpu_custom_call.1} parent=90 // pred_region
          %s1701 = sand.u32 %s317, 1
          %s1702 = scalar_lea.sflag [#allocation7], %s1701
          %s1703 = sand.u32 %s317, 1
          %s1704 = scalar_lea.vmem [#allocation8], %s1703
          %1706 = dma.done %s1702, 16
        $region95: #{tpu_custom_call.1} parent=90 // pred_fallthru
          _
      $region91: #{tpu_custom_call.1} parent=5 // pred_fallthru
        _
    $region6: #{tpu_custom_call.1} parent=1 // loop_footer
      %s29 = sadd.s32 1, %s25
    $region7: #{tpu_custom_call.1} parent=1 // loop_footer_branch
      %24 = sbr.rel target = $region3
    $region8: #{tpu_custom_call.1} parent=1 // loop_exit
      _
    %1707 = vsyncpa [#allocation6], 1
    %s1708 = scalar_lea.sflag [#allocation6], 1
    %1709 = vsyncpa %s1708, 1
    %1710 = vsyncpa [#allocation7], 1
    %s1711 = scalar_lea.sflag [#allocation7], 1
    %1712 = vsyncpa %s1711, 1

</llo_original>
